<compile_context>
chip_gen: v7x
topology: tpu7x:2x2x1
jax: 0.10.0
libtpu: 0.0.40
codegen_flags: <defaults>
</compile_context>

<pallas_src>
import functools
import math

import jax
import jax.numpy as jnp
from jax import lax
from jax.experimental import pallas as pl
from jax.experimental.pallas import tpu as pltpu


def _adaln(x, gamma, beta, eps):
    # x: (T, D), gamma/beta: (1, D).  rsqrt goes to the EUP slot.
    mean = jnp.mean(x, axis=-1, keepdims=True)
    var = jnp.mean((x - mean) ** 2, axis=-1, keepdims=True)
    return gamma * ((x - mean) * lax.rsqrt(var + eps)) + beta


def _gelu_exact(x):
    # nn.GELU() default = exact (erf-based) GELU.
    return 0.5 * x * (1.0 + lax.erf(x * (1.0 / math.sqrt(2.0))))


def transformer_block_kernel(
    x_ref, g1_ref, b1_ref, g2_ref, b2_ref,
    wq_ref, bq_ref, wkv_ref, bkv_ref, wout_ref, bout_ref,
    w1_ref, b1m_ref, w2_ref, b2m_ref,
    o_ref, kT_scr, v_scr, *, heads, eps, t_s, h_chunk, bf16_exp):
    qi = pl.program_id(1)
    _, S, D = x_ref.shape
    H = w1_ref.shape[1]
    hd = D // heads
    scale = 1.0 / math.sqrt(hd)
    bf16 = jnp.bfloat16
    n_kv_chunks = S // t_s
    n_h_chunks = H // h_chunk

    # ---- once per batch element: AdaLN1 + K/V over the full sequence,
    #      chunked over S to bound the VMEM spike.  K stored transposed.
    @pl.when(qi == 0)
    def _():
        for c in range(n_kv_chunks):
            r0 = c * t_s                                        # static
            xc = x_ref[0, pl.ds(r0, t_s), :]                    # (tS, D) f32
            hc = _adaln(xc, g1_ref[0], b1_ref[0], eps).astype(bf16)
            kvc = (jnp.dot(hc, wkv_ref[...],
                           preferred_element_type=jnp.float32)
                   + bkv_ref[...]).astype(bf16)                 # (tS, 2D)
            kT_scr[:, pl.ds(r0, t_s)] = kvc[:, :D].T            # (D, tS)
            v_scr[pl.ds(r0, t_s), :] = kvc[:, D:]               # (tS, D)

    # ---- per query tile: AdaLN1 + Q (scale folded into q) ----
    row0 = pl.multiple_of(qi * t_s, t_s)
    xt = x_ref[0, pl.ds(row0, t_s), :]                          # (tS, D) f32
    h1 = _adaln(xt, g1_ref[0], b1_ref[0], eps).astype(bf16)
    q = jnp.dot(h1, wq_ref[...],
                preferred_element_type=jnp.float32) + bq_ref[...]
    q = (q * scale).astype(bf16)

    # ---- multi-head attention: per-head outputs staged, one K=D out-proj ----
    head_outs = []
    for h in range(heads):
        lo, hi = h * hd, (h + 1) * hd
        qh = q[:, lo:hi]                                        # (tS, hd) bf16
        khT = kT_scr[lo:hi, :]                                  # (hd, S)  bf16
        vh = v_scr[:, lo:hi]                                    # (S, hd)  bf16
        s = jnp.dot(qh, khT, preferred_element_type=jnp.float32)  # (tS, S)
        m = jnp.max(s, axis=-1, keepdims=True)
        sm = s - m
        p = jnp.exp(sm.astype(bf16)) if bf16_exp else jnp.exp(sm)
        denom = jnp.sum(p.astype(jnp.float32), axis=-1, keepdims=True)
        oh = jnp.dot(p.astype(bf16), vh,
                     preferred_element_type=jnp.float32)        # (tS, hd)
        # deferred normalization: scale (tS, hd), not (tS, S)
        oh = oh * pl.reciprocal(denom, approx=True)
        head_outs.append(oh.astype(bf16))
    o_heads = jnp.concatenate(head_outs, axis=-1)               # (tS, D) bf16
    attn = jnp.dot(o_heads, wout_ref[...],
                   preferred_element_type=jnp.float32) + bout_ref[...]
    x1 = xt + attn                                              # residual 1

    # ---- AdaLN2 + MLP, tiled over the hidden dim H ----
    h2 = _adaln(x1, g2_ref[0], b2_ref[0], eps).astype(bf16)
    b1m = b1m_ref[...]                                          # (1, H)
    acc = jnp.zeros((t_s, D), jnp.float32)
    for c in range(n_h_chunks):
        lo, hi = c * h_chunk, (c + 1) * h_chunk
        m1 = (jnp.dot(h2, w1_ref[:, lo:hi],
                      preferred_element_type=jnp.float32) + b1m[:, lo:hi])
        m1 = _gelu_exact(m1).astype(bf16)                       # (tS, hc)
        acc = acc + jnp.dot(m1, w2_ref[lo:hi, :],
                            preferred_element_type=jnp.float32)
    o_ref[0] = (x1 + acc + b2m_ref[...]).astype(o_ref.dtype)    # residual 2


def transformer_block_adaln(x, g1, b1, g2, b2, params, *, heads=8, eps=1e-6):
    B, S, D = x.shape
    H = params["w1"].shape[1]
    assert D % heads == 0

    bf16 = jnp.bfloat16
    f32 = jnp.float32
    wq = params["wqkv"][:, :D].astype(bf16)
    wkv = params["wqkv"][:, D:].astype(bf16)
    bq = params["bqkv"][:D].reshape(1, D).astype(f32)
    bkv = params["bqkv"][D:].reshape(1, 2 * D).astype(f32)
    wout = params["wout"].astype(bf16)
    bout = params["bout"].reshape(1, D).astype(f32)
    w1 = params["w1"].astype(bf16)
    b1m = params["b1m"].reshape(1, H).astype(f32)
    w2 = params["w2"].astype(bf16)
    b2m = params["b2m"].reshape(1, D).astype(f32)

    g1r = g1.reshape(B, 1, D)
    b1r = b1.reshape(B, 1, D)
    g2r = g2.reshape(B, 1, D)
    b2r = b2.reshape(B, 1, D)

    # MLP hidden-dim tile: bounds the (tS, H) activation (v7x VMEM).
    h_chunk = H
    for cand in (2048, 1024, 512):
        if H > cand and H % cand == 0:
            h_chunk = cand
            break

    # bf16 exp on generations with a bf16 EUP (v6e / v7x); f32 on v5e & older.
    try:
        kind = jax.devices()[0].device_kind.lower()
    except Exception:
        kind = ""
    bf16_exp = ("v6" in kind) or ("v7" in kind)

    # VMEM cap: physical capacity minus headroom (v7x has only 64 MiB / TC).
    try:
        phys = int(pltpu.get_tpu_info().vmem_capacity_bytes)
    except Exception:
        phys = 64 << 20          # conservative fallback = v7x per-core VMEM
    cap = phys - (8 << 20)

    out_itemsize = jnp.dtype(x.dtype).itemsize

    def est(t_s, x_buffers):
        w_bytes = 2 * (4 * D * D + 2 * D * H)          # bf16 weights, Buffered(1)
        bias_bytes = 4 * (5 * D + H) + 8 * 4 * 4 * D   # biases + cond vectors
        x_bytes = x_buffers * S * D * 4
        o_bytes = 2 * t_s * D * out_itemsize
        scr_bytes = 2 * S * D * 2                      # K^T + V scratch (bf16)
        tmp_bytes = 4 * t_s * max(S, h_chunk) * 4 + 8 * t_s * D * 4
        return w_bytes + bias_bytes + x_bytes + o_bytes + scr_bytes + tmp_bytes

    # Sequence tile: biggest divisor tile that fits the VMEM cap (>= fix).
    cands = [c for c in (512, 256, 128) if S >= c and S % c == 0] or [S]
    t_s, x_buffers = cands[-1], 1
    for cand in cands:
        if est(cand, 2) <= cap:
            t_s, x_buffers = cand, 2
            break
        if est(cand, 1) <= cap:
            t_s, x_buffers = cand, 1
            break
    nq = S // t_s
    vmem_limit = int(min(max(est(t_s, x_buffers) + (4 << 20), 32 << 20), cap))

    def per_batch(shape, buffers=2):
        return pl.BlockSpec(shape, lambda b, q: (b,) + (0,) * (len(shape) - 1),
                            pipeline_mode=pl.Buffered(buffers))

    def resident(shape):
        # Constant-index weights/biases: single pipeline buffer (no waste).
        return pl.BlockSpec(shape, lambda b, q: (0,) * len(shape),
                            pipeline_mode=pl.Buffered(1))

    kernel = functools.partial(transformer_block_kernel, heads=heads, eps=eps,
                               t_s=t_s, h_chunk=h_chunk, bf16_exp=bf16_exp)

    return pl.pallas_call(
        kernel,
        out_shape=jax.ShapeDtypeStruct((B, S, D), x.dtype),
        grid=(B, nq),
        in_specs=[
            per_batch((1, S, D), x_buffers),   # x (full sequence per batch)
            per_batch((1, 1, D)),              # g1
            per_batch((1, 1, D)),              # b1
            per_batch((1, 1, D)),              # g2
            per_batch((1, 1, D)),              # b2
            resident((D, D)),                  # wq   (bf16)
            resident((1, D)),                  # bq
            resident((D, 2 * D)),              # wkv  (bf16)
            resident((1, 2 * D)),              # bkv
            resident((D, D)),                  # wout (bf16)
            resident((1, D)),                  # bout
            resident((D, H)),                  # w1   (bf16)
            resident((1, H)),                  # b1m
            resident((H, D)),                  # w2   (bf16)
            resident((1, D)),                  # b2m
        ],
        out_specs=pl.BlockSpec((1, t_s, D), lambda b, q: (b, q, 0)),
        scratch_shapes=[pltpu.VMEM((D, S), bf16),    # K^T (pre-transposed)
                        pltpu.VMEM((S, D), bf16)],   # V
        compiler_params=pltpu.CompilerParams(
            dimension_semantics=("parallel", "arbitrary"),
            vmem_limit_bytes=vmem_limit),
    )(x, g1r, b1r, g2r, b2r,
      wq, bq, wkv, bkv, wout, bout, w1, b1m, w2, b2m)


def reference_block(x, g1, b1, g2, b2, p, *, heads=8, eps=1e-6):
    """Pure-JAX f32 reference mirroring the PyTorch forward."""
    B, S, D = x.shape
    hd = D // heads

    def adaln(x, g, b):
        mean = x.mean(-1, keepdims=True)
        var = ((x - mean) ** 2).mean(-1, keepdims=True)
        return g[:, None, :] * (x - mean) / jnp.sqrt(var + eps) + b[:, None, :]

    h = adaln(x, g1, b1)
    qkv = h @ p["wqkv"] + p["bqkv"]
    q, k, v = jnp.split(qkv, 3, axis=-1)
    q = q.reshape(B, S, heads, hd).transpose(0, 2, 1, 3)
    k = k.reshape(B, S, heads, hd).transpose(0, 2, 1, 3)
    v = v.reshape(B, S, heads, hd).transpose(0, 2, 1, 3)
    s = (q @ k.transpose(0, 1, 3, 2)) / math.sqrt(hd)
    a = jax.nn.softmax(s, axis=-1)
    o = (a @ v).transpose(0, 2, 1, 3).reshape(B, S, D)
    o = o @ p["wout"] + p["bout"]
    x = x + o
    h2 = adaln(x, g2, b2)
    m = h2 @ p["w1"] + p["b1m"]
    m = jax.nn.gelu(m, approximate=False)
    m = m @ p["w2"] + p["b2m"]
    return x + m


if __name__ == "__main__":
    B, S, D = 2, 8, 32
    heads, mlp_ratio = 8, 4
    H = D * mlp_ratio

    key = jax.random.PRNGKey(0)
    keys = jax.random.split(key, 16)

    x = jax.random.normal(keys[0], (B, S, D), jnp.float32)
    g1 = 1.0 + 0.1 * jax.random.normal(keys[1], (B, D), jnp.float32)
    b1 = 0.1 * jax.random.normal(keys[2], (B, D), jnp.float32)
    g2 = 1.0 + 0.1 * jax.random.normal(keys[3], (B, D), jnp.float32)
    b2 = 0.1 * jax.random.normal(keys[4], (B, D), jnp.float32)

    params = {
        "wqkv": 0.05 * jax.random.normal(keys[5], (D, 3 * D), jnp.float32),
        "bqkv": 0.01 * jax.random.normal(keys[6], (3 * D,), jnp.float32),
        "wout": 0.05 * jax.random.normal(keys[7], (D, D), jnp.float32),
        "bout": 0.01 * jax.random.normal(keys[8], (D,), jnp.float32),
        "w1": 0.05 * jax.random.normal(keys[9], (D, H), jnp.float32),
        "b1m": 0.01 * jax.random.normal(keys[10], (H,), jnp.float32),
        "w2": 0.05 * jax.random.normal(keys[11], (H, D), jnp.float32),
        "b2m": 0.01 * jax.random.normal(keys[12], (D,), jnp.float32),
    }

    out = transformer_block_adaln(x, g1, b1, g2, b2, params,
                                  heads=heads, eps=1e-6)
    out = jax.block_until_ready(out)

    ref = reference_block(x, g1, b1, g2, b2, params, heads=heads, eps=1e-6)
    assert out.shape == (B, S, D)
    # bf16 matmul inputs (and bf16 exp on v6e/v7x) with f32 accumulation ->
    # loosened tolerance vs the f32 reference.
    max_err = float(jnp.max(jnp.abs(out - ref)))
    assert jnp.allclose(out, ref, atol=3e-2, rtol=3e-2), max_err

    print("KERNEL_OK")
</pallas_src>

<mosaic_0001>
module attributes {stable_mosaic.version = 11 : i64} {
  func.func @transformer_block_kernel(%arg0: i32, %arg1: i32, %arg2: memref<1x8x32xf32, #tpu.memory_space<vmem>>, %arg3: memref<1x1x32xf32, #tpu.memory_space<vmem>>, %arg4: memref<1x1x32xf32, #tpu.memory_space<vmem>>, %arg5: memref<1x1x32xf32, #tpu.memory_space<vmem>>, %arg6: memref<1x1x32xf32, #tpu.memory_space<vmem>>, %arg7: memref<32x32xbf16, #tpu.memory_space<vmem>>, %arg8: memref<1x32xf32, #tpu.memory_space<vmem>>, %arg9: memref<32x64xbf16, #tpu.memory_space<vmem>>, %arg10: memref<1x64xf32, #tpu.memory_space<vmem>>, %arg11: memref<32x32xbf16, #tpu.memory_space<vmem>>, %arg12: memref<1x32xf32, #tpu.memory_space<vmem>>, %arg13: memref<32x128xbf16, #tpu.memory_space<vmem>>, %arg14: memref<1x128xf32, #tpu.memory_space<vmem>>, %arg15: memref<128x32xbf16, #tpu.memory_space<vmem>>, %arg16: memref<1x32xf32, #tpu.memory_space<vmem>>, %arg17: memref<1x8x32xf32, #tpu.memory_space<vmem>>, %arg18: memref<32x8xbf16, #tpu.memory_space<vmem>>, %arg19: memref<8x32xbf16, #tpu.memory_space<vmem>>) attributes {dimension_semantics = [#tpu.dimension_semantics<parallel>, #tpu.dimension_semantics<arbitrary>], iteration_bounds = array<i64: 2, 1>, scalar_prefetch = 0 : i64, scratch_operands = 2 : i64, tpu.core_type = #tpu.core_type<tc>, window_params = [{pipeline_mode = #tpu.pipeline_mode<double_buffered>, transform_indices = @transform_0, window_bounds = array<i64: 1, 8, 32>}, {pipeline_mode = #tpu.pipeline_mode<double_buffered>, transform_indices = @transform_1, window_bounds = array<i64: 1, 1, 32>}, {pipeline_mode = #tpu.pipeline_mode<double_buffered>, transform_indices = @transform_2, window_bounds = array<i64: 1, 1, 32>}, {pipeline_mode = #tpu.pipeline_mode<double_buffered>, transform_indices = @transform_3, window_bounds = array<i64: 1, 1, 32>}, {pipeline_mode = #tpu.pipeline_mode<double_buffered>, transform_indices = @transform_4, window_bounds = array<i64: 1, 1, 32>}, {pipeline_mode = #tpu.pipeline_mode<synchronous>, transform_indices = @transform_5, window_bounds = array<i64: 32, 32>}, {pipeline_mode = #tpu.pipeline_mode<synchronous>, transform_indices = @transform_6, window_bounds = array<i64: 1, 32>}, {pipeline_mode = #tpu.pipeline_mode<synchronous>, transform_indices = @transform_7, window_bounds = array<i64: 32, 64>}, {pipeline_mode = #tpu.pipeline_mode<synchronous>, transform_indices = @transform_8, window_bounds = array<i64: 1, 64>}, {pipeline_mode = #tpu.pipeline_mode<synchronous>, transform_indices = @transform_9, window_bounds = array<i64: 32, 32>}, {pipeline_mode = #tpu.pipeline_mode<synchronous>, transform_indices = @transform_10, window_bounds = array<i64: 1, 32>}, {pipeline_mode = #tpu.pipeline_mode<synchronous>, transform_indices = @transform_11, window_bounds = array<i64: 32, 128>}, {pipeline_mode = #tpu.pipeline_mode<synchronous>, transform_indices = @transform_12, window_bounds = array<i64: 1, 128>}, {pipeline_mode = #tpu.pipeline_mode<synchronous>, transform_indices = @transform_13, window_bounds = array<i64: 128, 32>}, {pipeline_mode = #tpu.pipeline_mode<synchronous>, transform_indices = @transform_14, window_bounds = array<i64: 1, 32>}, {transform_indices = @transform_15, window_bounds = array<i64: 1, 8, 32>}]} {
    %c0_i32 = arith.constant 0 : i32
    %0 = arith.cmpi eq, %arg1, %c0_i32 : i32
    %1 = arith.extui %0 : i1 to i32
    %c0_i32_0 = arith.constant 0 : i32
    %2 = arith.cmpi ne, %1, %c0_i32_0 : i32
    scf.if %2 {
      %c0_108 = arith.constant 0 : index
      %c0_109 = arith.constant 0 : index
      %c0_110 = arith.constant 0 : index
      %238 = vector.load %arg2[%c0_108, %c0_109, %c0_110] : memref<1x8x32xf32, #tpu.memory_space<vmem>>, vector<1x8x32xf32>
      %239 = vector.shape_cast %238 : vector<1x8x32xf32> to vector<8x32xf32>
      %c0_111 = arith.constant 0 : index
      %c0_112 = arith.constant 0 : index
      %c0_113 = arith.constant 0 : index
      %240 = vector.load %arg3[%c0_111, %c0_112, %c0_113] : memref<1x1x32xf32, #tpu.memory_space<vmem>>, vector<1x1x32xf32>
      %241 = vector.shape_cast %240 : vector<1x1x32xf32> to vector<1x32xf32>
      %c0_114 = arith.constant 0 : index
      %c0_115 = arith.constant 0 : index
      %c0_116 = arith.constant 0 : index
      %242 = vector.load %arg4[%c0_114, %c0_115, %c0_116] : memref<1x1x32xf32, #tpu.memory_space<vmem>>, vector<1x1x32xf32>
      %243 = vector.shape_cast %242 : vector<1x1x32xf32> to vector<1x32xf32>
      %cst_117 = arith.constant dense<0.000000e+00> : vector<8xf32>
      %244 = vector.multi_reduction <add>, %239, %cst_117 [1] : vector<8x32xf32> to vector<8xf32>
      %245 = vector.shape_cast %244 : vector<8xf32> to vector<8x1xf32>
      %cst_118 = arith.constant 3.200000e+01 : f32
      %246 = vector.broadcast %cst_118 : f32 to vector<8x1xf32>
      %247 = arith.divf %245, %246 : vector<8x1xf32>
      %248 = vector.broadcast %247 : vector<8x1xf32> to vector<8x32xf32>
      %249 = arith.subf %239, %248 : vector<8x32xf32>
      %250 = arith.mulf %249, %249 : vector<8x32xf32>
      %cst_119 = arith.constant dense<0.000000e+00> : vector<8xf32>
      %251 = vector.multi_reduction <add>, %250, %cst_119 [1] : vector<8x32xf32> to vector<8xf32>
      %252 = vector.shape_cast %251 : vector<8xf32> to vector<8x1xf32>
      %cst_120 = arith.constant 3.200000e+01 : f32
      %253 = vector.broadcast %cst_120 : f32 to vector<8x1xf32>
      %254 = arith.divf %252, %253 : vector<8x1xf32>
      %255 = vector.broadcast %247 : vector<8x1xf32> to vector<8x32xf32>
      %256 = arith.subf %239, %255 : vector<8x32xf32>
      %cst_121 = arith.constant 9.99999997E-7 : f32
      %257 = vector.broadcast %cst_121 : f32 to vector<8x1xf32>
      %258 = arith.addf %254, %257 : vector<8x1xf32>
      %259 = math.rsqrt %258 : vector<8x1xf32>
      %260 = vector.broadcast %259 : vector<8x1xf32> to vector<8x32xf32>
      %261 = arith.mulf %256, %260 : vector<8x32xf32>
      %262 = vector.broadcast %241 : vector<1x32xf32> to vector<8x32xf32>
      %263 = arith.mulf %262, %261 : vector<8x32xf32>
      %264 = vector.broadcast %243 : vector<1x32xf32> to vector<8x32xf32>
      %265 = arith.addf %263, %264 : vector<8x32xf32>
      %266 = arith.truncf %265 : vector<8x32xf32> to vector<8x32xbf16>
      %c0_122 = arith.constant 0 : index
      %c0_123 = arith.constant 0 : index
      %267 = vector.load %arg9[%c0_122, %c0_123] : memref<32x64xbf16, #tpu.memory_space<vmem>>, vector<32x64xbf16>
      %cst_124 = arith.constant dense<0.000000e+00> : vector<8x64xf32>
      %268 = tpu.matmul %266, %267, %cst_124 {dimension_numbers = #tpu.dot_dimension_numbers<[1], [0], [0], [1], [0, 0, 1, 1], [], []>} : vector<8x32xbf16>, vector<32x64xbf16>, vector<8x64xf32> -> vector<8x64xf32>
      %c0_125 = arith.constant 0 : index
      %c0_126 = arith.constant 0 : index
      %269 = vector.load %arg10[%c0_125, %c0_126] : memref<1x64xf32, #tpu.memory_space<vmem>>, vector<1x64xf32>
      %270 = vector.broadcast %269 : vector<1x64xf32> to vector<8x64xf32>
      %271 = arith.addf %268, %270 : vector<8x64xf32>
      %272 = arith.truncf %271 : vector<8x64xf32> to vector<8x64xbf16>
      %273 = vector.extract_strided_slice %272 {offsets = [0, 0], sizes = [8, 32], strides = [1, 1]} : vector<8x64xbf16> to vector<8x32xbf16>
      %274 = tpu.transpose %273, [1, 0] : vector<8x32xbf16> -> vector<32x8xbf16>
      %c0_127 = arith.constant 0 : index
      %c0_128 = arith.constant 0 : index
      %275 = vector.load %arg18[%c0_127, %c0_128] : memref<32x8xbf16, #tpu.memory_space<vmem>>, vector<32x8xbf16>
      tpu.vector_store %arg18[%c0_127, %c0_128], %274 {strides = array<i32>} : memref<32x8xbf16, #tpu.memory_space<vmem>>, vector<32x8xbf16>,
      %276 = vector.extract_strided_slice %272 {offsets = [0, 32], sizes = [8, 32], strides = [1, 1]} : vector<8x64xbf16> to vector<8x32xbf16>
      %c0_129 = arith.constant 0 : index
      %c0_130 = arith.constant 0 : index
      %277 = vector.load %arg19[%c0_129, %c0_130] : memref<8x32xbf16, #tpu.memory_space<vmem>>, vector<8x32xbf16>
      tpu.vector_store %arg19[%c0_129, %c0_130], %276 {strides = array<i32>} : memref<8x32xbf16, #tpu.memory_space<vmem>>, vector<8x32xbf16>,
    } else {
    }
    %c8_i32 = arith.constant 8 : i32
    %3 = arith.muli %arg1, %c8_i32 : i32
    %4 = tpu.assume_multiple %3, 8 : i32
    %c0 = arith.constant 0 : index
    %5 = arith.index_cast %4 : i32 to index
    %c0_1 = arith.constant 0 : index
    %6 = vector.load %arg2[%c0, %5, %c0_1] : memref<1x8x32xf32, #tpu.memory_space<vmem>>, vector<1x8x32xf32>
    %7 = vector.shape_cast %6 : vector<1x8x32xf32> to vector<8x32xf32>
    %c0_2 = arith.constant 0 : index
    %c0_3 = arith.constant 0 : index
    %c0_4 = arith.constant 0 : index
    %8 = vector.load %arg3[%c0_2, %c0_3, %c0_4] : memref<1x1x32xf32, #tpu.memory_space<vmem>>, vector<1x1x32xf32>
    %9 = vector.shape_cast %8 : vector<1x1x32xf32> to vector<1x32xf32>
    %c0_5 = arith.constant 0 : index
    %c0_6 = arith.constant 0 : index
    %c0_7 = arith.constant 0 : index
    %10 = vector.load %arg4[%c0_5, %c0_6, %c0_7] : memref<1x1x32xf32, #tpu.memory_space<vmem>>, vector<1x1x32xf32>
    %11 = vector.shape_cast %10 : vector<1x1x32xf32> to vector<1x32xf32>
    %cst = arith.constant dense<0.000000e+00> : vector<8xf32>
    %12 = vector.multi_reduction <add>, %7, %cst [1] : vector<8x32xf32> to vector<8xf32>
    %13 = vector.shape_cast %12 : vector<8xf32> to vector<8x1xf32>
    %cst_8 = arith.constant 3.200000e+01 : f32
    %14 = vector.broadcast %cst_8 : f32 to vector<8x1xf32>
    %15 = arith.divf %13, %14 : vector<8x1xf32>
    %16 = vector.broadcast %15 : vector<8x1xf32> to vector<8x32xf32>
    %17 = arith.subf %7, %16 : vector<8x32xf32>
    %18 = arith.mulf %17, %17 : vector<8x32xf32>
    %cst_9 = arith.constant dense<0.000000e+00> : vector<8xf32>
    %19 = vector.multi_reduction <add>, %18, %cst_9 [1] : vector<8x32xf32> to vector<8xf32>
    %20 = vector.shape_cast %19 : vector<8xf32> to vector<8x1xf32>
    %cst_10 = arith.constant 3.200000e+01 : f32
    %21 = vector.broadcast %cst_10 : f32 to vector<8x1xf32>
    %22 = arith.divf %20, %21 : vector<8x1xf32>
    %23 = vector.broadcast %15 : vector<8x1xf32> to vector<8x32xf32>
    %24 = arith.subf %7, %23 : vector<8x32xf32>
    %cst_11 = arith.constant 9.99999997E-7 : f32
    %25 = vector.broadcast %cst_11 : f32 to vector<8x1xf32>
    %26 = arith.addf %22, %25 : vector<8x1xf32>
    %27 = math.rsqrt %26 : vector<8x1xf32>
    %28 = vector.broadcast %27 : vector<8x1xf32> to vector<8x32xf32>
    %29 = arith.mulf %24, %28 : vector<8x32xf32>
    %30 = vector.broadcast %9 : vector<1x32xf32> to vector<8x32xf32>
    %31 = arith.mulf %30, %29 : vector<8x32xf32>
    %32 = vector.broadcast %11 : vector<1x32xf32> to vector<8x32xf32>
    %33 = arith.addf %31, %32 : vector<8x32xf32>
    %34 = arith.truncf %33 : vector<8x32xf32> to vector<8x32xbf16>
    %c0_12 = arith.constant 0 : index
    %c0_13 = arith.constant 0 : index
    %35 = vector.load %arg7[%c0_12, %c0_13] : memref<32x32xbf16, #tpu.memory_space<vmem>>, vector<32x32xbf16>
    %cst_14 = arith.constant dense<0.000000e+00> : vector<8x32xf32>
    %36 = tpu.matmul %34, %35, %cst_14 {dimension_numbers = #tpu.dot_dimension_numbers<[1], [0], [0], [1], [0, 0, 1, 1], [], []>} : vector<8x32xbf16>, vector<32x32xbf16>, vector<8x32xf32> -> vector<8x32xf32>
    %c0_15 = arith.constant 0 : index
    %c0_16 = arith.constant 0 : index
    %37 = vector.load %arg8[%c0_15, %c0_16] : memref<1x32xf32, #tpu.memory_space<vmem>>, vector<1x32xf32>
    %38 = vector.broadcast %37 : vector<1x32xf32> to vector<8x32xf32>
    %39 = arith.addf %36, %38 : vector<8x32xf32>
    %cst_17 = arith.constant 5.000000e-01 : f32
    %40 = vector.broadcast %cst_17 : f32 to vector<8x32xf32>
    %41 = arith.mulf %39, %40 : vector<8x32xf32>
    %42 = arith.truncf %41 : vector<8x32xf32> to vector<8x32xbf16>
    %43 = vector.extract_strided_slice %42 {offsets = [0, 0], sizes = [8, 4], strides = [1, 1]} : vector<8x32xbf16> to vector<8x4xbf16>
    %c0_18 = arith.constant 0 : index
    %c0_19 = arith.constant 0 : index
    %44 = vector.load %arg18[%c0_18, %c0_19] : memref<32x8xbf16, #tpu.memory_space<vmem>>, vector<4x8xbf16>
    %c0_20 = arith.constant 0 : index
    %c0_21 = arith.constant 0 : index
    %45 = vector.load %arg19[%c0_20, %c0_21] : memref<8x32xbf16, #tpu.memory_space<vmem>>, vector<8x4xbf16>
    %cst_22 = arith.constant dense<0.000000e+00> : vector<8x8xf32>
    %46 = tpu.matmul %43, %44, %cst_22 {dimension_numbers = #tpu.dot_dimension_numbers<[1], [0], [0], [1], [0, 0, 1, 1], [], []>} : vector<8x4xbf16>, vector<4x8xbf16>, vector<8x8xf32> -> vector<8x8xf32>
    %cst_23 = arith.constant dense<0xFF800000> : vector<8xf32>
    %47 = vector.multi_reduction <maximumf>, %46, %cst_23 [1] : vector<8x8xf32> to vector<8xf32>
    %48 = vector.shape_cast %47 : vector<8xf32> to vector<8x1xf32>
    %49 = vector.broadcast %48 : vector<8x1xf32> to vector<8x8xf32>
    %50 = arith.subf %46, %49 : vector<8x8xf32>
    %51 = math.exp %50 : vector<8x8xf32>
    %cst_24 = arith.constant dense<0.000000e+00> : vector<8xf32>
    %52 = vector.multi_reduction <add>, %51, %cst_24 [1] : vector<8x8xf32> to vector<8xf32>
    %53 = vector.shape_cast %52 : vector<8xf32> to vector<8x1xf32>
    %54 = arith.truncf %51 : vector<8x8xf32> to vector<8x8xbf16>
    %cst_25 = arith.constant dense<0.000000e+00> : vector<8x4xf32>
    %55 = tpu.matmul %54, %45, %cst_25 {dimension_numbers = #tpu.dot_dimension_numbers<[1], [0], [0], [1], [0, 0, 1, 1], [], []>} : vector<8x8xbf16>, vector<8x4xbf16>, vector<8x4xf32> -> vector<8x4xf32>
    %56 = tpu.reciprocal %53 {approx = true} : vector<8x1xf32> -> vector<8x1xf32>
    %57 = vector.broadcast %56 : vector<8x1xf32> to vector<8x4xf32>
    %58 = arith.mulf %55, %57 : vector<8x4xf32>
    %59 = arith.truncf %58 : vector<8x4xf32> to vector<8x4xbf16>
    %60 = vector.extract_strided_slice %42 {offsets = [0, 4], sizes = [8, 4], strides = [1, 1]} : vector<8x32xbf16> to vector<8x4xbf16>
    %c4 = arith.constant 4 : index
    %c0_26 = arith.constant 0 : index
    %61 = vector.load %arg18[%c4, %c0_26] : memref<32x8xbf16, #tpu.memory_space<vmem>>, vector<4x8xbf16>
    %c0_27 = arith.constant 0 : index
    %c4_28 = arith.constant 4 : index
    %62 = vector.load %arg19[%c0_27, %c4_28] : memref<8x32xbf16, #tpu.memory_space<vmem>>, vector<8x4xbf16>
    %cst_29 = arith.constant dense<0.000000e+00> : vector<8x8xf32>
    %63 = tpu.matmul %60, %61, %cst_29 {dimension_numbers = #tpu.dot_dimension_numbers<[1], [0], [0], [1], [0, 0, 1, 1], [], []>} : vector<8x4xbf16>, vector<4x8xbf16>, vector<8x8xf32> -> vector<8x8xf32>
    %cst_30 = arith.constant dense<0xFF800000> : vector<8xf32>
    %64 = vector.multi_reduction <maximumf>, %63, %cst_30 [1] : vector<8x8xf32> to vector<8xf32>
    %65 = vector.shape_cast %64 : vector<8xf32> to vector<8x1xf32>
    %66 = vector.broadcast %65 : vector<8x1xf32> to vector<8x8xf32>
    %67 = arith.subf %63, %66 : vector<8x8xf32>
    %68 = math.exp %67 : vector<8x8xf32>
    %cst_31 = arith.constant dense<0.000000e+00> : vector<8xf32>
    %69 = vector.multi_reduction <add>, %68, %cst_31 [1] : vector<8x8xf32> to vector<8xf32>
    %70 = vector.shape_cast %69 : vector<8xf32> to vector<8x1xf32>
    %71 = arith.truncf %68 : vector<8x8xf32> to vector<8x8xbf16>
    %cst_32 = arith.constant dense<0.000000e+00> : vector<8x4xf32>
    %72 = tpu.matmul %71, %62, %cst_32 {dimension_numbers = #tpu.dot_dimension_numbers<[1], [0], [0], [1], [0, 0, 1, 1], [], []>} : vector<8x8xbf16>, vector<8x4xbf16>, vector<8x4xf32> -> vector<8x4xf32>
    %73 = tpu.reciprocal %70 {approx = true} : vector<8x1xf32> -> vector<8x1xf32>
    %74 = vector.broadcast %73 : vector<8x1xf32> to vector<8x4xf32>
    %75 = arith.mulf %72, %74 : vector<8x4xf32>
    %76 = arith.truncf %75 : vector<8x4xf32> to vector<8x4xbf16>
    %77 = vector.extract_strided_slice %42 {offsets = [0, 8], sizes = [8, 4], strides = [1, 1]} : vector<8x32xbf16> to vector<8x4xbf16>
    %c8 = arith.constant 8 : index
    %c0_33 = arith.constant 0 : index
    %78 = vector.load %arg18[%c8, %c0_33] : memref<32x8xbf16, #tpu.memory_space<vmem>>, vector<4x8xbf16>
    %c0_34 = arith.constant 0 : index
    %c8_35 = arith.constant 8 : index
    %79 = vector.load %arg19[%c0_34, %c8_35] : memref<8x32xbf16, #tpu.memory_space<vmem>>, vector<8x4xbf16>
    %cst_36 = arith.constant dense<0.000000e+00> : vector<8x8xf32>
    %80 = tpu.matmul %77, %78, %cst_36 {dimension_numbers = #tpu.dot_dimension_numbers<[1], [0], [0], [1], [0, 0, 1, 1], [], []>} : vector<8x4xbf16>, vector<4x8xbf16>, vector<8x8xf32> -> vector<8x8xf32>
    %cst_37 = arith.constant dense<0xFF800000> : vector<8xf32>
    %81 = vector.multi_reduction <maximumf>, %80, %cst_37 [1] : vector<8x8xf32> to vector<8xf32>
    %82 = vector.shape_cast %81 : vector<8xf32> to vector<8x1xf32>
    %83 = vector.broadcast %82 : vector<8x1xf32> to vector<8x8xf32>
    %84 = arith.subf %80, %83 : vector<8x8xf32>
    %85 = math.exp %84 : vector<8x8xf32>
    %cst_38 = arith.constant dense<0.000000e+00> : vector<8xf32>
    %86 = vector.multi_reduction <add>, %85, %cst_38 [1] : vector<8x8xf32> to vector<8xf32>
    %87 = vector.shape_cast %86 : vector<8xf32> to vector<8x1xf32>
    %88 = arith.truncf %85 : vector<8x8xf32> to vector<8x8xbf16>
    %cst_39 = arith.constant dense<0.000000e+00> : vector<8x4xf32>
    %89 = tpu.matmul %88, %79, %cst_39 {dimension_numbers = #tpu.dot_dimension_numbers<[1], [0], [0], [1], [0, 0, 1, 1], [], []>} : vector<8x8xbf16>, vector<8x4xbf16>, vector<8x4xf32> -> vector<8x4xf32>
    %90 = tpu.reciprocal %87 {approx = true} : vector<8x1xf32> -> vector<8x1xf32>
    %91 = vector.broadcast %90 : vector<8x1xf32> to vector<8x4xf32>
    %92 = arith.mulf %89, %91 : vector<8x4xf32>
    %93 = arith.truncf %92 : vector<8x4xf32> to vector<8x4xbf16>
    %94 = vector.extract_strided_slice %42 {offsets = [0, 12], sizes = [8, 4], strides = [1, 1]} : vector<8x32xbf16> to vector<8x4xbf16>
    %c12 = arith.constant 12 : index
    %c0_40 = arith.constant 0 : index
    %95 = vector.load %arg18[%c12, %c0_40] : memref<32x8xbf16, #tpu.memory_space<vmem>>, vector<4x8xbf16>
    %c0_41 = arith.constant 0 : index
    %c12_42 = arith.constant 12 : index
    %96 = vector.load %arg19[%c0_41, %c12_42] : memref<8x32xbf16, #tpu.memory_space<vmem>>, vector<8x4xbf16>
    %cst_43 = arith.constant dense<0.000000e+00> : vector<8x8xf32>
    %97 = tpu.matmul %94, %95, %cst_43 {dimension_numbers = #tpu.dot_dimension_numbers<[1], [0], [0], [1], [0, 0, 1, 1], [], []>} : vector<8x4xbf16>, vector<4x8xbf16>, vector<8x8xf32> -> vector<8x8xf32>
    %cst_44 = arith.constant dense<0xFF800000> : vector<8xf32>
    %98 = vector.multi_reduction <maximumf>, %97, %cst_44 [1] : vector<8x8xf32> to vector<8xf32>
    %99 = vector.shape_cast %98 : vector<8xf32> to vector<8x1xf32>
    %100 = vector.broadcast %99 : vector<8x1xf32> to vector<8x8xf32>
    %101 = arith.subf %97, %100 : vector<8x8xf32>
    %102 = math.exp %101 : vector<8x8xf32>
    %cst_45 = arith.constant dense<0.000000e+00> : vector<8xf32>
    %103 = vector.multi_reduction <add>, %102, %cst_45 [1] : vector<8x8xf32> to vector<8xf32>
    %104 = vector.shape_cast %103 : vector<8xf32> to vector<8x1xf32>
    %105 = arith.truncf %102 : vector<8x8xf32> to vector<8x8xbf16>
    %cst_46 = arith.constant dense<0.000000e+00> : vector<8x4xf32>
    %106 = tpu.matmul %105, %96, %cst_46 {dimension_numbers = #tpu.dot_dimension_numbers<[1], [0], [0], [1], [0, 0, 1, 1], [], []>} : vector<8x8xbf16>, vector<8x4xbf16>, vector<8x4xf32> -> vector<8x4xf32>
    %107 = tpu.reciprocal %104 {approx = true} : vector<8x1xf32> -> vector<8x1xf32>
    %108 = vector.broadcast %107 : vector<8x1xf32> to vector<8x4xf32>
    %109 = arith.mulf %106, %108 : vector<8x4xf32>
    %110 = arith.truncf %109 : vector<8x4xf32> to vector<8x4xbf16>
    %111 = vector.extract_strided_slice %42 {offsets = [0, 16], sizes = [8, 4], strides = [1, 1]} : vector<8x32xbf16> to vector<8x4xbf16>
    %c16 = arith.constant 16 : index
    %c0_47 = arith.constant 0 : index
    %112 = vector.load %arg18[%c16, %c0_47] : memref<32x8xbf16, #tpu.memory_space<vmem>>, vector<4x8xbf16>
    %c0_48 = arith.constant 0 : index
    %c16_49 = arith.constant 16 : index
    %113 = vector.load %arg19[%c0_48, %c16_49] : memref<8x32xbf16, #tpu.memory_space<vmem>>, vector<8x4xbf16>
    %cst_50 = arith.constant dense<0.000000e+00> : vector<8x8xf32>
    %114 = tpu.matmul %111, %112, %cst_50 {dimension_numbers = #tpu.dot_dimension_numbers<[1], [0], [0], [1], [0, 0, 1, 1], [], []>} : vector<8x4xbf16>, vector<4x8xbf16>, vector<8x8xf32> -> vector<8x8xf32>
    %cst_51 = arith.constant dense<0xFF800000> : vector<8xf32>
    %115 = vector.multi_reduction <maximumf>, %114, %cst_51 [1] : vector<8x8xf32> to vector<8xf32>
    %116 = vector.shape_cast %115 : vector<8xf32> to vector<8x1xf32>
    %117 = vector.broadcast %116 : vector<8x1xf32> to vector<8x8xf32>
    %118 = arith.subf %114, %117 : vector<8x8xf32>
    %119 = math.exp %118 : vector<8x8xf32>
    %cst_52 = arith.constant dense<0.000000e+00> : vector<8xf32>
    %120 = vector.multi_reduction <add>, %119, %cst_52 [1] : vector<8x8xf32> to vector<8xf32>
    %121 = vector.shape_cast %120 : vector<8xf32> to vector<8x1xf32>
    %122 = arith.truncf %119 : vector<8x8xf32> to vector<8x8xbf16>
    %cst_53 = arith.constant dense<0.000000e+00> : vector<8x4xf32>
    %123 = tpu.matmul %122, %113, %cst_53 {dimension_numbers = #tpu.dot_dimension_numbers<[1], [0], [0], [1], [0, 0, 1, 1], [], []>} : vector<8x8xbf16>, vector<8x4xbf16>, vector<8x4xf32> -> vector<8x4xf32>
    %124 = tpu.reciprocal %121 {approx = true} : vector<8x1xf32> -> vector<8x1xf32>
    %125 = vector.broadcast %124 : vector<8x1xf32> to vector<8x4xf32>
    %126 = arith.mulf %123, %125 : vector<8x4xf32>
    %127 = arith.truncf %126 : vector<8x4xf32> to vector<8x4xbf16>
    %128 = vector.extract_strided_slice %42 {offsets = [0, 20], sizes = [8, 4], strides = [1, 1]} : vector<8x32xbf16> to vector<8x4xbf16>
    %c20 = arith.constant 20 : index
    %c0_54 = arith.constant 0 : index
    %129 = vector.load %arg18[%c20, %c0_54] : memref<32x8xbf16, #tpu.memory_space<vmem>>, vector<4x8xbf16>
    %c0_55 = arith.constant 0 : index
    %c20_56 = arith.constant 20 : index
    %130 = vector.load %arg19[%c0_55, %c20_56] : memref<8x32xbf16, #tpu.memory_space<vmem>>, vector<8x4xbf16>
    %cst_57 = arith.constant dense<0.000000e+00> : vector<8x8xf32>
    %131 = tpu.matmul %128, %129, %cst_57 {dimension_numbers = #tpu.dot_dimension_numbers<[1], [0], [0], [1], [0, 0, 1, 1], [], []>} : vector<8x4xbf16>, vector<4x8xbf16>, vector<8x8xf32> -> vector<8x8xf32>
    %cst_58 = arith.constant dense<0xFF800000> : vector<8xf32>
    %132 = vector.multi_reduction <maximumf>, %131, %cst_58 [1] : vector<8x8xf32> to vector<8xf32>
    %133 = vector.shape_cast %132 : vector<8xf32> to vector<8x1xf32>
    %134 = vector.broadcast %133 : vector<8x1xf32> to vector<8x8xf32>
    %135 = arith.subf %131, %134 : vector<8x8xf32>
    %136 = math.exp %135 : vector<8x8xf32>
    %cst_59 = arith.constant dense<0.000000e+00> : vector<8xf32>
    %137 = vector.multi_reduction <add>, %136, %cst_59 [1] : vector<8x8xf32> to vector<8xf32>
    %138 = vector.shape_cast %137 : vector<8xf32> to vector<8x1xf32>
    %139 = arith.truncf %136 : vector<8x8xf32> to vector<8x8xbf16>
    %cst_60 = arith.constant dense<0.000000e+00> : vector<8x4xf32>
    %140 = tpu.matmul %139, %130, %cst_60 {dimension_numbers = #tpu.dot_dimension_numbers<[1], [0], [0], [1], [0, 0, 1, 1], [], []>} : vector<8x8xbf16>, vector<8x4xbf16>, vector<8x4xf32> -> vector<8x4xf32>
    %141 = tpu.reciprocal %138 {approx = true} : vector<8x1xf32> -> vector<8x1xf32>
    %142 = vector.broadcast %141 : vector<8x1xf32> to vector<8x4xf32>
    %143 = arith.mulf %140, %142 : vector<8x4xf32>
    %144 = arith.truncf %143 : vector<8x4xf32> to vector<8x4xbf16>
    %145 = vector.extract_strided_slice %42 {offsets = [0, 24], sizes = [8, 4], strides = [1, 1]} : vector<8x32xbf16> to vector<8x4xbf16>
    %c24 = arith.constant 24 : index
    %c0_61 = arith.constant 0 : index
    %146 = vector.load %arg18[%c24, %c0_61] : memref<32x8xbf16, #tpu.memory_space<vmem>>, vector<4x8xbf16>
    %c0_62 = arith.constant 0 : index
    %c24_63 = arith.constant 24 : index
    %147 = vector.load %arg19[%c0_62, %c24_63] : memref<8x32xbf16, #tpu.memory_space<vmem>>, vector<8x4xbf16>
    %cst_64 = arith.constant dense<0.000000e+00> : vector<8x8xf32>
    %148 = tpu.matmul %145, %146, %cst_64 {dimension_numbers = #tpu.dot_dimension_numbers<[1], [0], [0], [1], [0, 0, 1, 1], [], []>} : vector<8x4xbf16>, vector<4x8xbf16>, vector<8x8xf32> -> vector<8x8xf32>
    %cst_65 = arith.constant dense<0xFF800000> : vector<8xf32>
    %149 = vector.multi_reduction <maximumf>, %148, %cst_65 [1] : vector<8x8xf32> to vector<8xf32>
    %150 = vector.shape_cast %149 : vector<8xf32> to vector<8x1xf32>
    %151 = vector.broadcast %150 : vector<8x1xf32> to vector<8x8xf32>
    %152 = arith.subf %148, %151 : vector<8x8xf32>
    %153 = math.exp %152 : vector<8x8xf32>
    %cst_66 = arith.constant dense<0.000000e+00> : vector<8xf32>
    %154 = vector.multi_reduction <add>, %153, %cst_66 [1] : vector<8x8xf32> to vector<8xf32>
    %155 = vector.shape_cast %154 : vector<8xf32> to vector<8x1xf32>
    %156 = arith.truncf %153 : vector<8x8xf32> to vector<8x8xbf16>
    %cst_67 = arith.constant dense<0.000000e+00> : vector<8x4xf32>
    %157 = tpu.matmul %156, %147, %cst_67 {dimension_numbers = #tpu.dot_dimension_numbers<[1], [0], [0], [1], [0, 0, 1, 1], [], []>} : vector<8x8xbf16>, vector<8x4xbf16>, vector<8x4xf32> -> vector<8x4xf32>
    %158 = tpu.reciprocal %155 {approx = true} : vector<8x1xf32> -> vector<8x1xf32>
    %159 = vector.broadcast %158 : vector<8x1xf32> to vector<8x4xf32>
    %160 = arith.mulf %157, %159 : vector<8x4xf32>
    %161 = arith.truncf %160 : vector<8x4xf32> to vector<8x4xbf16>
    %162 = vector.extract_strided_slice %42 {offsets = [0, 28], sizes = [8, 4], strides = [1, 1]} : vector<8x32xbf16> to vector<8x4xbf16>
    %c28 = arith.constant 28 : index
    %c0_68 = arith.constant 0 : index
    %163 = vector.load %arg18[%c28, %c0_68] : memref<32x8xbf16, #tpu.memory_space<vmem>>, vector<4x8xbf16>
    %c0_69 = arith.constant 0 : index
    %c28_70 = arith.constant 28 : index
    %164 = vector.load %arg19[%c0_69, %c28_70] : memref<8x32xbf16, #tpu.memory_space<vmem>>, vector<8x4xbf16>
    %cst_71 = arith.constant dense<0.000000e+00> : vector<8x8xf32>
    %165 = tpu.matmul %162, %163, %cst_71 {dimension_numbers = #tpu.dot_dimension_numbers<[1], [0], [0], [1], [0, 0, 1, 1], [], []>} : vector<8x4xbf16>, vector<4x8xbf16>, vector<8x8xf32> -> vector<8x8xf32>
    %cst_72 = arith.constant dense<0xFF800000> : vector<8xf32>
    %166 = vector.multi_reduction <maximumf>, %165, %cst_72 [1] : vector<8x8xf32> to vector<8xf32>
    %167 = vector.shape_cast %166 : vector<8xf32> to vector<8x1xf32>
    %168 = vector.broadcast %167 : vector<8x1xf32> to vector<8x8xf32>
    %169 = arith.subf %165, %168 : vector<8x8xf32>
    %170 = math.exp %169 : vector<8x8xf32>
    %cst_73 = arith.constant dense<0.000000e+00> : vector<8xf32>
    %171 = vector.multi_reduction <add>, %170, %cst_73 [1] : vector<8x8xf32> to vector<8xf32>
    %172 = vector.shape_cast %171 : vector<8xf32> to vector<8x1xf32>
    %173 = arith.truncf %170 : vector<8x8xf32> to vector<8x8xbf16>
    %cst_74 = arith.constant dense<0.000000e+00> : vector<8x4xf32>
    %174 = tpu.matmul %173, %164, %cst_74 {dimension_numbers = #tpu.dot_dimension_numbers<[1], [0], [0], [1], [0, 0, 1, 1], [], []>} : vector<8x8xbf16>, vector<8x4xbf16>, vector<8x4xf32> -> vector<8x4xf32>
    %175 = tpu.reciprocal %172 {approx = true} : vector<8x1xf32> -> vector<8x1xf32>
    %176 = vector.broadcast %175 : vector<8x1xf32> to vector<8x4xf32>
    %177 = arith.mulf %174, %176 : vector<8x4xf32>
    %178 = arith.truncf %177 : vector<8x4xf32> to vector<8x4xbf16>
    %179 = tpu.concatenate %59, %76, %93, %110, %127, %144, %161, %178 in 1 : vector<8x4xbf16>, vector<8x4xbf16>, vector<8x4xbf16>, vector<8x4xbf16>, vector<8x4xbf16>, vector<8x4xbf16>, vector<8x4xbf16>, vector<8x4xbf16> -> vector<8x32xbf16>
    %c0_75 = arith.constant 0 : index
    %c0_76 = arith.constant 0 : index
    %180 = vector.load %arg11[%c0_75, %c0_76] : memref<32x32xbf16, #tpu.memory_space<vmem>>, vector<32x32xbf16>
    %cst_77 = arith.constant dense<0.000000e+00> : vector<8x32xf32>
    %181 = tpu.matmul %179, %180, %cst_77 {dimension_numbers = #tpu.dot_dimension_numbers<[1], [0], [0], [1], [0, 0, 1, 1], [], []>} : vector<8x32xbf16>, vector<32x32xbf16>, vector<8x32xf32> -> vector<8x32xf32>
    %c0_78 = arith.constant 0 : index
    %c0_79 = arith.constant 0 : index
    %182 = vector.load %arg12[%c0_78, %c0_79] : memref<1x32xf32, #tpu.memory_space<vmem>>, vector<1x32xf32>
    %183 = vector.broadcast %182 : vector<1x32xf32> to vector<8x32xf32>
    %184 = arith.addf %181, %183 : vector<8x32xf32>
    %185 = arith.addf %7, %184 : vector<8x32xf32>
    %c0_80 = arith.constant 0 : index
    %c0_81 = arith.constant 0 : index
    %c0_82 = arith.constant 0 : index
    %186 = vector.load %arg5[%c0_80, %c0_81, %c0_82] : memref<1x1x32xf32, #tpu.memory_space<vmem>>, vector<1x1x32xf32>
    %187 = vector.shape_cast %186 : vector<1x1x32xf32> to vector<1x32xf32>
    %c0_83 = arith.constant 0 : index
    %c0_84 = arith.constant 0 : index
    %c0_85 = arith.constant 0 : index
    %188 = vector.load %arg6[%c0_83, %c0_84, %c0_85] : memref<1x1x32xf32, #tpu.memory_space<vmem>>, vector<1x1x32xf32>
    %189 = vector.shape_cast %188 : vector<1x1x32xf32> to vector<1x32xf32>
    %cst_86 = arith.constant dense<0.000000e+00> : vector<8xf32>
    %190 = vector.multi_reduction <add>, %185, %cst_86 [1] : vector<8x32xf32> to vector<8xf32>
    %191 = vector.shape_cast %190 : vector<8xf32> to vector<8x1xf32>
    %cst_87 = arith.constant 3.200000e+01 : f32
    %192 = vector.broadcast %cst_87 : f32 to vector<8x1xf32>
    %193 = arith.divf %191, %192 : vector<8x1xf32>
    %194 = vector.broadcast %193 : vector<8x1xf32> to vector<8x32xf32>
    %195 = arith.subf %185, %194 : vector<8x32xf32>
    %196 = arith.mulf %195, %195 : vector<8x32xf32>
    %cst_88 = arith.constant dense<0.000000e+00> : vector<8xf32>
    %197 = vector.multi_reduction <add>, %196, %cst_88 [1] : vector<8x32xf32> to vector<8xf32>
    %198 = vector.shape_cast %197 : vector<8xf32> to vector<8x1xf32>
    %cst_89 = arith.constant 3.200000e+01 : f32
    %199 = vector.broadcast %cst_89 : f32 to vector<8x1xf32>
    %200 = arith.divf %198, %199 : vector<8x1xf32>
    %201 = vector.broadcast %193 : vector<8x1xf32> to vector<8x32xf32>
    %202 = arith.subf %185, %201 : vector<8x32xf32>
    %cst_90 = arith.constant 9.99999997E-7 : f32
    %203 = vector.broadcast %cst_90 : f32 to vector<8x1xf32>
    %204 = arith.addf %200, %203 : vector<8x1xf32>
    %205 = math.rsqrt %204 : vector<8x1xf32>
    %206 = vector.broadcast %205 : vector<8x1xf32> to vector<8x32xf32>
    %207 = arith.mulf %202, %206 : vector<8x32xf32>
    %208 = vector.broadcast %187 : vector<1x32xf32> to vector<8x32xf32>
    %209 = arith.mulf %208, %207 : vector<8x32xf32>
    %210 = vector.broadcast %189 : vector<1x32xf32> to vector<8x32xf32>
    %211 = arith.addf %209, %210 : vector<8x32xf32>
    %212 = arith.truncf %211 : vector<8x32xf32> to vector<8x32xbf16>
    %c0_91 = arith.constant 0 : index
    %c0_92 = arith.constant 0 : index
    %213 = vector.load %arg14[%c0_91, %c0_92] : memref<1x128xf32, #tpu.memory_space<vmem>>, vector<1x128xf32>
    %cst_93 = arith.constant 0.000000e+00 : f32
    %214 = vector.broadcast %cst_93 : f32 to vector<8x32xf32>
    %c0_94 = arith.constant 0 : index
    %c0_95 = arith.constant 0 : index
    %215 = vector.load %arg13[%c0_94, %c0_95] : memref<32x128xbf16, #tpu.memory_space<vmem>>, vector<32x128xbf16>
    %cst_96 = arith.constant dense<0.000000e+00> : vector<8x128xf32>
    %216 = tpu.matmul %212, %215, %cst_96 {dimension_numbers = #tpu.dot_dimension_numbers<[1], [0], [0], [1], [0, 0, 1, 1], [], []>} : vector<8x32xbf16>, vector<32x128xbf16>, vector<8x128xf32> -> vector<8x128xf32>
    %217 = vector.broadcast %213 : vector<1x128xf32> to vector<8x128xf32>
    %218 = arith.addf %216, %217 : vector<8x128xf32>
    %cst_97 = arith.constant 5.000000e-01 : f32
    %219 = vector.broadcast %cst_97 : f32 to vector<8x128xf32>
    %220 = arith.mulf %219, %218 : vector<8x128xf32>
    %cst_98 = arith.constant 0.707106769 : f32
    %221 = vector.broadcast %cst_98 : f32 to vector<8x128xf32>
    %222 = arith.mulf %218, %221 : vector<8x128xf32>
    %223 = math.erf %222 : vector<8x128xf32>
    %cst_99 = arith.constant 1.000000e+00 : f32
    %224 = vector.broadcast %cst_99 : f32 to vector<8x128xf32>
    %225 = arith.addf %224, %223 : vector<8x128xf32>
    %226 = arith.mulf %220, %225 : vector<8x128xf32>
    %227 = arith.truncf %226 : vector<8x128xf32> to vector<8x128xbf16>
    %c0_100 = arith.constant 0 : index
    %c0_101 = arith.constant 0 : index
    %228 = vector.load %arg15[%c0_100, %c0_101] : memref<128x32xbf16, #tpu.memory_space<vmem>>, vector<128x32xbf16>
    %cst_102 = arith.constant dense<0.000000e+00> : vector<8x32xf32>
    %229 = tpu.matmul %227, %228, %cst_102 {dimension_numbers = #tpu.dot_dimension_numbers<[1], [0], [0], [1], [0, 0, 1, 1], [], []>} : vector<8x128xbf16>, vector<128x32xbf16>, vector<8x32xf32> -> vector<8x32xf32>
    %230 = arith.addf %214, %229 : vector<8x32xf32>
    %231 = arith.addf %185, %230 : vector<8x32xf32>
    %c0_103 = arith.constant 0 : index
    %c0_104 = arith.constant 0 : index
    %232 = vector.load %arg16[%c0_103, %c0_104] : memref<1x32xf32, #tpu.memory_space<vmem>>, vector<1x32xf32>
    %233 = vector.broadcast %232 : vector<1x32xf32> to vector<8x32xf32>
    %234 = arith.addf %231, %233 : vector<8x32xf32>
    %c0_105 = arith.constant 0 : index
    %c0_106 = arith.constant 0 : index
    %c0_107 = arith.constant 0 : index
    %235 = vector.load %arg17[%c0_105, %c0_106, %c0_107] : memref<1x8x32xf32, #tpu.memory_space<vmem>>, vector<1x8x32xf32>
    %236 = vector.shape_cast %235 : vector<1x8x32xf32> to vector<8x32xf32>
    %237 = vector.shape_cast %234 : vector<8x32xf32> to vector<1x8x32xf32>
    tpu.vector_store %arg17[%c0_105, %c0_106, %c0_107], %237 {strides = array<i32>} : memref<1x8x32xf32, #tpu.memory_space<vmem>>, vector<1x8x32xf32>,
    return
  }
  func.func @transform_0(%arg0: i32, %arg1: i32) -> (i32, i32, i32) {
    %c0_i32 = arith.constant 0 : i32
    %c0_i32_0 = arith.constant 0 : i32
    %c0_i32_1 = arith.constant 0 : i32
    return %arg0, %c0_i32, %c0_i32_0 : i32, i32, i32
  }
  func.func @transform_1(%arg0: i32, %arg1: i32) -> (i32, i32, i32) {
    %c0_i32 = arith.constant 0 : i32
    %c0_i32_0 = arith.constant 0 : i32
    %c0_i32_1 = arith.constant 0 : i32
    return %arg0, %c0_i32, %c0_i32_0 : i32, i32, i32
  }
  func.func @transform_2(%arg0: i32, %arg1: i32) -> (i32, i32, i32) {
    %c0_i32 = arith.constant 0 : i32
    %c0_i32_0 = arith.constant 0 : i32
    %c0_i32_1 = arith.constant 0 : i32
    return %arg0, %c0_i32, %c0_i32_0 : i32, i32, i32
  }
  func.func @transform_3(%arg0: i32, %arg1: i32) -> (i32, i32, i32) {
    %c0_i32 = arith.constant 0 : i32
    %c0_i32_0 = arith.constant 0 : i32
    %c0_i32_1 = arith.constant 0 : i32
    return %arg0, %c0_i32, %c0_i32_0 : i32, i32, i32
  }
  func.func @transform_4(%arg0: i32, %arg1: i32) -> (i32, i32, i32) {
    %c0_i32 = arith.constant 0 : i32
    %c0_i32_0 = arith.constant 0 : i32
    %c0_i32_1 = arith.constant 0 : i32
    return %arg0, %c0_i32, %c0_i32_0 : i32, i32, i32
  }
  func.func @transform_5(%arg0: i32, %arg1: i32) -> (i32, i32) {
    %c0_i32 = arith.constant 0 : i32
    %c0_i32_0 = arith.constant 0 : i32
    %c0_i32_1 = arith.constant 0 : i32
    return %c0_i32, %c0_i32_0 : i32, i32
  }
  func.func @transform_6(%arg0: i32, %arg1: i32) -> (i32, i32) {
    %c0_i32 = arith.constant 0 : i32
    %c0_i32_0 = arith.constant 0 : i32
    %c0_i32_1 = arith.constant 0 : i32
    return %c0_i32, %c0_i32_0 : i32, i32
  }
  func.func @transform_7(%arg0: i32, %arg1: i32) -> (i32, i32) {
    %c0_i32 = arith.constant 0 : i32
    %c0_i32_0 = arith.constant 0 : i32
    %c0_i32_1 = arith.constant 0 : i32
    return %c0_i32, %c0_i32_0 : i32, i32
  }
  func.func @transform_8(%arg0: i32, %arg1: i32) -> (i32, i32) {
    %c0_i32 = arith.constant 0 : i32
    %c0_i32_0 = arith.constant 0 : i32
    %c0_i32_1 = arith.constant 0 : i32
    return %c0_i32, %c0_i32_0 : i32, i32
  }
  func.func @transform_9(%arg0: i32, %arg1: i32) -> (i32, i32) {
    %c0_i32 = arith.constant 0 : i32
    %c0_i32_0 = arith.constant 0 : i32
    %c0_i32_1 = arith.constant 0 : i32
    return %c0_i32, %c0_i32_0 : i32, i32
  }
  func.func @transform_10(%arg0: i32, %arg1: i32) -> (i32, i32) {
    %c0_i32 = arith.constant 0 : i32
    %c0_i32_0 = arith.constant 0 : i32
    %c0_i32_1 = arith.constant 0 : i32
    return %c0_i32, %c0_i32_0 : i32, i32
  }
  func.func @transform_11(%arg0: i32, %arg1: i32) -> (i32, i32) {
    %c0_i32 = arith.constant 0 : i32
    %c0_i32_0 = arith.constant 0 : i32
    %c0_i32_1 = arith.constant 0 : i32
    return %c0_i32, %c0_i32_0 : i32, i32
  }
  func.func @transform_12(%arg0: i32, %arg1: i32) -> (i32, i32) {
    %c0_i32 = arith.constant 0 : i32
    %c0_i32_0 = arith.constant 0 : i32
    %c0_i32_1 = arith.constant 0 : i32
    return %c0_i32, %c0_i32_0 : i32, i32
  }
  func.func @transform_13(%arg0: i32, %arg1: i32) -> (i32, i32) {
    %c0_i32 = arith.constant 0 : i32
    %c0_i32_0 = arith.constant 0 : i32
    %c0_i32_1 = arith.constant 0 : i32
    return %c0_i32, %c0_i32_0 : i32, i32
  }
  func.func @transform_14(%arg0: i32, %arg1: i32) -> (i32, i32) {
    %c0_i32 = arith.constant 0 : i32
    %c0_i32_0 = arith.constant 0 : i32
    %c0_i32_1 = arith.constant 0 : i32
    return %c0_i32, %c0_i32_0 : i32, i32
  }
  func.func @transform_15(%arg0: i32, %arg1: i32) -> (i32, i32, i32) {
    %c0_i32 = arith.constant 0 : i32
    %c0_i32_0 = arith.constant 0 : i32
    return %arg0, %arg1, %c0_i32 : i32, i32, i32
  }
}

</mosaic_0001>

<llo_original>
// kernel: tpu_custom_call.1
$region0: #{tpu_custom_call.1}
  #allocation0 [shape = 'u32[]', space=smem, size = 0x4, offset = 0x4, fixed_abs, tag = 'smem constant byte address 0x4 - core index']
  #allocation1 [shape = 'u32[144,128]{1,0:T(1,128)}', space=vmem, size = 0x12000, scoped, tag = 'internal scratch']
  #allocation2 [shape = 'bf16[32,8]{1,0:T(16,128)(2,1)}', space=vmem, size = 0x2000, scoped, tag = 'scratch operand']
  #allocation3 [shape = 'bf16[8,32]{1,0:T(8,128)(2,1)}', space=vmem, size = 0x800, scoped, tag = 'scratch operand']
  %s0 = inlined_call_operand.vmem [shape: f32[2,8,32], index: 0, kind: input, shape index: {}]
  %s1 = inlined_call_operand.vmem [shape: f32[2,1,32], index: 1, kind: input, shape index: {}]
  %s2 = inlined_call_operand.vmem [shape: f32[2,1,32], index: 2, kind: input, shape index: {}]
  %s3 = inlined_call_operand.vmem [shape: f32[2,1,32], index: 3, kind: input, shape index: {}]
  %s4 = inlined_call_operand.vmem [shape: f32[2,1,32], index: 4, kind: input, shape index: {}]
  %s5 = inlined_call_operand.vmem [shape: bf16[32,32], index: 5, kind: input, shape index: {}]
  %s6 = inlined_call_operand.vmem [shape: f32[1,32], index: 6, kind: input, shape index: {}]
  %s7 = inlined_call_operand.vmem [shape: bf16[32,64], index: 7, kind: input, shape index: {}]
  %s8 = inlined_call_operand.vmem [shape: f32[1,64], index: 8, kind: input, shape index: {}]
  %s9 = inlined_call_operand.vmem [shape: bf16[32,32], index: 9, kind: input, shape index: {}]
  %s10 = inlined_call_operand.vmem [shape: f32[1,32], index: 10, kind: input, shape index: {}]
  %s11 = inlined_call_operand.vmem [shape: bf16[32,128], index: 11, kind: input, shape index: {}]
  %s12 = inlined_call_operand.vmem [shape: f32[1,128], index: 12, kind: input, shape index: {}]
  %s13 = inlined_call_operand.vmem [shape: bf16[128,32], index: 13, kind: input, shape index: {}]
  %s14 = inlined_call_operand.vmem [shape: f32[1,32], index: 14, kind: input, shape index: {}]
  %s15 = inlined_call_operand.hbm [shape: f32[2,8,32], index: 15, kind: output, shape index: {}]
  %s16 = sld [smem:[#allocation0]]
  $region97: #{tpu_custom_call.1} parent=0
    _
  %s18 = ssub.s32 1, %s16
  %s19 = scalar_select 0, %s18, %s16
  $region1: #{tpu_custom_call.1} parent=0
    #allocation4 [shape = 'u8[8192]{0}', space=vmem, size = 0x2000, scoped, tag = 'output window, operand 0']
    #allocation5 [shape = 's32[2]{0}', space=sflag, size = 0x8, scoped, tag = 'scoped memory for tpu_custom_call.1']
    %20 = vsyncpa [#allocation5], 0
    %s21 = scalar_lea.sflag [#allocation5], 1
    %22 = vsyncpa %s21, 0
    loop: start=0, step=1, limit=4
    $region2: #{tpu_custom_call.1} parent=1 // loop_pre_header
      _
    $region3: #{tpu_custom_call.1} parent=1 // loop_header
      %s24 = sphi 0, %s28
      %p25 = scmp.ge.s32.totalorder %s24, 4
      %s31 = sphi 0, %s43
      %s32 = sphi 0, %s39
      %s33 = sphi 0, %s31
      %s34 = sphi 0, %s32
      %s35 = sphi 0, %s33
      %s36 = sphi 0, %s34
      %s46 = sphi 0, %s48
      %s49 = sphi 0, %s46
      %s50 = sphi 0, %s49
      %s66 = sphi 0, %s50
      %s72 = sphi 0, %s74
      %s75 = sphi 0, %s72
      %s76 = sphi 0, %s75
      %s92 = sphi 0, %s76
      %s98 = sphi 0, %s100
      %s101 = sphi 0, %s98
      %s102 = sphi 0, %s101
      %s118 = sphi 0, %s102
      %s124 = sphi 0, %s126
      %s127 = sphi 0, %s124
      %s128 = sphi 0, %s127
      %s144 = sphi 0, %s128
      %s150 = sphi 0, %s152
      %s153 = sphi 0, %s150
      %s154 = sphi 0, %s153
      %s170 = sphi 0, %s154
      %s174 = sphi 0, %s174
      %s176 = sphi 0, %s174
      %s177 = sphi 0, %s176
      %s191 = sphi 0, %s177
      %s195 = sphi 0, %s195
      %s197 = sphi 0, %s195
      %s198 = sphi 0, %s197
      %s212 = sphi 0, %s198
      %s216 = sphi 0, %s216
      %s218 = sphi 0, %s216
      %s219 = sphi 0, %s218
      %s233 = sphi 0, %s219
      %s237 = sphi 0, %s237
      %s239 = sphi 0, %s237
      %s240 = sphi 0, %s239
      %s254 = sphi 0, %s240
      %s258 = sphi 0, %s258
      %s260 = sphi 0, %s258
      %s261 = sphi 0, %s260
      %s275 = sphi 0, %s261
      %s279 = sphi 0, %s279
      %s281 = sphi 0, %s279
      %s282 = sphi 0, %s281
      %s296 = sphi 0, %s282
      %s300 = sphi 0, %s300
      %s302 = sphi 0, %s300
      %s303 = sphi 0, %s302
      %s317 = sphi 0, %s303
      %s321 = sphi 0, %s321
      %s323 = sphi 0, %s321
      %s324 = sphi 0, %s323
      %s338 = sphi 0, %s324
      %s342 = sphi 0, %s342
      %s344 = sphi 0, %s342
      %s345 = sphi 0, %s344
      %s359 = sphi 0, %s345
      %s363 = sphi 0, %s363
      %s365 = sphi 0, %s363
      %s366 = sphi 0, %s365
      %s380 = sphi 0, %s366
      %s388 = sphi 0, %s390
      %s391 = sphi 0, %s388
      %s392 = sphi 0, %s391
      %s408 = sphi 0, %s392
    $region4: #{tpu_custom_call.1} parent=1 // loop_header_branch
      %27 = sbr.rel (%p25) target = $region8
    $region5: #{tpu_custom_call.1} parent=1 // loop_body
      %s29 = ssub.s32 %s24, 1
      %s30 = ssub.s32 %s24, 2
      %s37 = sadd.s32 1, %s32
      %p38 = scmp.ge.s32.totalorder %s37, 1
      %s39 = scalar_select %p38, 0, %s37
      %s40 = sadd.s32 1, %s31
      %s41 = scalar_select %p38, %s40, %s31
      %p42 = scmp.ge.s32.totalorder %s41, 2
      %s43 = scalar_select %p42, 0, %s41
      %s44 = ssub.s32 %s31, %s43
      %p45 = scmp.eq.s32.totalorder %s44, 0
      %s47 = sadd.s32 %s46, 1
      %s48 = scalar_select %p45, %s46, %s47
      %p51 = pneg %p45
      %p52 = scmp.eq.s32.totalorder %s24, 1
      %p53 = por %p51, %p52
      %p54 = scmp.ne.s32.totalorder %s46, %s49
      %p55 = scmp.eq.s32.totalorder %s24, 0
      %p56 = por %p54, %p55
      %p57 = scmp.ne.s32.totalorder %s46, %s49
      %p58 = scmp.eq.s32.totalorder %s29, 1
      %p59 = por %p57, %p58
      %p60 = scmp.ne.s32.totalorder %s49, %s50
      %p61 = scmp.eq.s32.totalorder %s29, 0
      %p62 = por %p60, %p61
      %p63 = scmp.ne.s32.totalorder %s49, %s50
      %p64 = scmp.eq.s32.totalorder %s30, 1
      %p65 = por %p63, %p64
      %p67 = scmp.ne.s32.totalorder %s50, %s66
      %p68 = scmp.eq.s32.totalorder %s30, 0
      %p69 = por %p67, %p68
      %s70 = ssub.s32 %s31, %s43
      %p71 = scmp.eq.s32.totalorder %s70, 0
      %s73 = sadd.s32 %s72, 1
      %s74 = scalar_select %p71, %s72, %s73
      %p77 = pneg %p71
      %p78 = scmp.eq.s32.totalorder %s24, 1
      %p79 = por %p77, %p78
      %p80 = scmp.ne.s32.totalorder %s72, %s75
      %p81 = scmp.eq.s32.totalorder %s24, 0
      %p82 = por %p80, %p81
      %p83 = scmp.ne.s32.totalorder %s72, %s75
      %p84 = scmp.eq.s32.totalorder %s29, 1
      %p85 = por %p83, %p84
      %p86 = scmp.ne.s32.totalorder %s75, %s76
      %p87 = scmp.eq.s32.totalorder %s29, 0
      %p88 = por %p86, %p87
      %p89 = scmp.ne.s32.totalorder %s75, %s76
      %p90 = scmp.eq.s32.totalorder %s30, 1
      %p91 = por %p89, %p90
      %p93 = scmp.ne.s32.totalorder %s76, %s92
      %p94 = scmp.eq.s32.totalorder %s30, 0
      %p95 = por %p93, %p94
      %s96 = ssub.s32 %s31, %s43
      %p97 = scmp.eq.s32.totalorder %s96, 0
      %s99 = sadd.s32 %s98, 1
      %s100 = scalar_select %p97, %s98, %s99
      %p103 = pneg %p97
      %p104 = scmp.eq.s32.totalorder %s24, 1
      %p105 = por %p103, %p104
      %p106 = scmp.ne.s32.totalorder %s98, %s101
      %p107 = scmp.eq.s32.totalorder %s24, 0
      %p108 = por %p106, %p107
      %p109 = scmp.ne.s32.totalorder %s98, %s101
      %p110 = scmp.eq.s32.totalorder %s29, 1
      %p111 = por %p109, %p110
      %p112 = scmp.ne.s32.totalorder %s101, %s102
      %p113 = scmp.eq.s32.totalorder %s29, 0
      %p114 = por %p112, %p113
      %p115 = scmp.ne.s32.totalorder %s101, %s102
      %p116 = scmp.eq.s32.totalorder %s30, 1
      %p117 = por %p115, %p116
      %p119 = scmp.ne.s32.totalorder %s102, %s118
      %p120 = scmp.eq.s32.totalorder %s30, 0
      %p121 = por %p119, %p120
      %s122 = ssub.s32 %s31, %s43
      %p123 = scmp.eq.s32.totalorder %s122, 0
      %s125 = sadd.s32 %s124, 1
      %s126 = scalar_select %p123, %s124, %s125
      %p129 = pneg %p123
      %p130 = scmp.eq.s32.totalorder %s24, 1
      %p131 = por %p129, %p130
      %p132 = scmp.ne.s32.totalorder %s124, %s127
      %p133 = scmp.eq.s32.totalorder %s24, 0
      %p134 = por %p132, %p133
      %p135 = scmp.ne.s32.totalorder %s124, %s127
      %p136 = scmp.eq.s32.totalorder %s29, 1
      %p137 = por %p135, %p136
      %p138 = scmp.ne.s32.totalorder %s127, %s128
      %p139 = scmp.eq.s32.totalorder %s29, 0
      %p140 = por %p138, %p139
      %p141 = scmp.ne.s32.totalorder %s127, %s128
      %p142 = scmp.eq.s32.totalorder %s30, 1
      %p143 = por %p141, %p142
      %p145 = scmp.ne.s32.totalorder %s128, %s144
      %p146 = scmp.eq.s32.totalorder %s30, 0
      %p147 = por %p145, %p146
      %s148 = ssub.s32 %s31, %s43
      %p149 = scmp.eq.s32.totalorder %s148, 0
      %s151 = sadd.s32 %s150, 1
      %s152 = scalar_select %p149, %s150, %s151
      %p155 = pneg %p149
      %p156 = scmp.eq.s32.totalorder %s24, 1
      %p157 = por %p155, %p156
      %p158 = scmp.ne.s32.totalorder %s150, %s153
      %p159 = scmp.eq.s32.totalorder %s24, 0
      %p160 = por %p158, %p159
      %p161 = scmp.ne.s32.totalorder %s150, %s153
      %p162 = scmp.eq.s32.totalorder %s29, 1
      %p163 = por %p161, %p162
      %p164 = scmp.ne.s32.totalorder %s153, %s154
      %p165 = scmp.eq.s32.totalorder %s29, 0
      %p166 = por %p164, %p165
      %p167 = scmp.ne.s32.totalorder %s153, %s154
      %p168 = scmp.eq.s32.totalorder %s30, 1
      %p169 = por %p167, %p168
      %p171 = scmp.ne.s32.totalorder %s154, %s170
      %p172 = scmp.eq.s32.totalorder %s30, 0
      %p173 = por %p171, %p172
      %s175 = sadd.s32 %s174, 1
      %p178 = scmp.eq.s32.totalorder %s24, 1
      %p179 = scmp.ne.s32.totalorder %s174, %s176
      %p180 = scmp.eq.s32.totalorder %s24, 0
      %p181 = por %p179, %p180
      %p182 = scmp.ne.s32.totalorder %s174, %s176
      %p183 = scmp.eq.s32.totalorder %s29, 1
      %p184 = por %p182, %p183
      %p185 = scmp.ne.s32.totalorder %s176, %s177
      %p186 = scmp.eq.s32.totalorder %s29, 0
      %p187 = por %p185, %p186
      %p188 = scmp.ne.s32.totalorder %s176, %s177
      %p189 = scmp.eq.s32.totalorder %s30, 1
      %p190 = por %p188, %p189
      %p192 = scmp.ne.s32.totalorder %s177, %s191
      %p193 = scmp.eq.s32.totalorder %s30, 0
      %p194 = por %p192, %p193
      %s196 = sadd.s32 %s195, 1
      %p199 = scmp.eq.s32.totalorder %s24, 1
      %p200 = scmp.ne.s32.totalorder %s195, %s197
      %p201 = scmp.eq.s32.totalorder %s24, 0
      %p202 = por %p200, %p201
      %p203 = scmp.ne.s32.totalorder %s195, %s197
      %p204 = scmp.eq.s32.totalorder %s29, 1
      %p205 = por %p203, %p204
      %p206 = scmp.ne.s32.totalorder %s197, %s198
      %p207 = scmp.eq.s32.totalorder %s29, 0
      %p208 = por %p206, %p207
      %p209 = scmp.ne.s32.totalorder %s197, %s198
      %p210 = scmp.eq.s32.totalorder %s30, 1
      %p211 = por %p209, %p210
      %p213 = scmp.ne.s32.totalorder %s198, %s212
      %p214 = scmp.eq.s32.totalorder %s30, 0
      %p215 = por %p213, %p214
      %s217 = sadd.s32 %s216, 1
      %p220 = scmp.eq.s32.totalorder %s24, 1
      %p221 = scmp.ne.s32.totalorder %s216, %s218
      %p222 = scmp.eq.s32.totalorder %s24, 0
      %p223 = por %p221, %p222
      %p224 = scmp.ne.s32.totalorder %s216, %s218
      %p225 = scmp.eq.s32.totalorder %s29, 1
      %p226 = por %p224, %p225
      %p227 = scmp.ne.s32.totalorder %s218, %s219
      %p228 = scmp.eq.s32.totalorder %s29, 0
      %p229 = por %p227, %p228
      %p230 = scmp.ne.s32.totalorder %s218, %s219
      %p231 = scmp.eq.s32.totalorder %s30, 1
      %p232 = por %p230, %p231
      %p234 = scmp.ne.s32.totalorder %s219, %s233
      %p235 = scmp.eq.s32.totalorder %s30, 0
      %p236 = por %p234, %p235
      %s238 = sadd.s32 %s237, 1
      %p241 = scmp.eq.s32.totalorder %s24, 1
      %p242 = scmp.ne.s32.totalorder %s237, %s239
      %p243 = scmp.eq.s32.totalorder %s24, 0
      %p244 = por %p242, %p243
      %p245 = scmp.ne.s32.totalorder %s237, %s239
      %p246 = scmp.eq.s32.totalorder %s29, 1
      %p247 = por %p245, %p246
      %p248 = scmp.ne.s32.totalorder %s239, %s240
      %p249 = scmp.eq.s32.totalorder %s29, 0
      %p250 = por %p248, %p249
      %p251 = scmp.ne.s32.totalorder %s239, %s240
      %p252 = scmp.eq.s32.totalorder %s30, 1
      %p253 = por %p251, %p252
      %p255 = scmp.ne.s32.totalorder %s240, %s254
      %p256 = scmp.eq.s32.totalorder %s30, 0
      %p257 = por %p255, %p256
      %s259 = sadd.s32 %s258, 1
      %p262 = scmp.eq.s32.totalorder %s24, 1
      %p263 = scmp.ne.s32.totalorder %s258, %s260
      %p264 = scmp.eq.s32.totalorder %s24, 0
      %p265 = por %p263, %p264
      %p266 = scmp.ne.s32.totalorder %s258, %s260
      %p267 = scmp.eq.s32.totalorder %s29, 1
      %p268 = por %p266, %p267
      %p269 = scmp.ne.s32.totalorder %s260, %s261
      %p270 = scmp.eq.s32.totalorder %s29, 0
      %p271 = por %p269, %p270
      %p272 = scmp.ne.s32.totalorder %s260, %s261
      %p273 = scmp.eq.s32.totalorder %s30, 1
      %p274 = por %p272, %p273
      %p276 = scmp.ne.s32.totalorder %s261, %s275
      %p277 = scmp.eq.s32.totalorder %s30, 0
      %p278 = por %p276, %p277
      %s280 = sadd.s32 %s279, 1
      %p283 = scmp.eq.s32.totalorder %s24, 1
      %p284 = scmp.ne.s32.totalorder %s279, %s281
      %p285 = scmp.eq.s32.totalorder %s24, 0
      %p286 = por %p284, %p285
      %p287 = scmp.ne.s32.totalorder %s279, %s281
      %p288 = scmp.eq.s32.totalorder %s29, 1
      %p289 = por %p287, %p288
      %p290 = scmp.ne.s32.totalorder %s281, %s282
      %p291 = scmp.eq.s32.totalorder %s29, 0
      %p292 = por %p290, %p291
      %p293 = scmp.ne.s32.totalorder %s281, %s282
      %p294 = scmp.eq.s32.totalorder %s30, 1
      %p295 = por %p293, %p294
      %p297 = scmp.ne.s32.totalorder %s282, %s296
      %p298 = scmp.eq.s32.totalorder %s30, 0
      %p299 = por %p297, %p298
      %s301 = sadd.s32 %s300, 1
      %p304 = scmp.eq.s32.totalorder %s24, 1
      %p305 = scmp.ne.s32.totalorder %s300, %s302
      %p306 = scmp.eq.s32.totalorder %s24, 0
      %p307 = por %p305, %p306
      %p308 = scmp.ne.s32.totalorder %s300, %s302
      %p309 = scmp.eq.s32.totalorder %s29, 1
      %p310 = por %p308, %p309
      %p311 = scmp.ne.s32.totalorder %s302, %s303
      %p312 = scmp.eq.s32.totalorder %s29, 0
      %p313 = por %p311, %p312
      %p314 = scmp.ne.s32.totalorder %s302, %s303
      %p315 = scmp.eq.s32.totalorder %s30, 1
      %p316 = por %p314, %p315
      %p318 = scmp.ne.s32.totalorder %s303, %s317
      %p319 = scmp.eq.s32.totalorder %s30, 0
      %p320 = por %p318, %p319
      %s322 = sadd.s32 %s321, 1
      %p325 = scmp.eq.s32.totalorder %s24, 1
      %p326 = scmp.ne.s32.totalorder %s321, %s323
      %p327 = scmp.eq.s32.totalorder %s24, 0
      %p328 = por %p326, %p327
      %p329 = scmp.ne.s32.totalorder %s321, %s323
      %p330 = scmp.eq.s32.totalorder %s29, 1
      %p331 = por %p329, %p330
      %p332 = scmp.ne.s32.totalorder %s323, %s324
      %p333 = scmp.eq.s32.totalorder %s29, 0
      %p334 = por %p332, %p333
      %p335 = scmp.ne.s32.totalorder %s323, %s324
      %p336 = scmp.eq.s32.totalorder %s30, 1
      %p337 = por %p335, %p336
      %p339 = scmp.ne.s32.totalorder %s324, %s338
      %p340 = scmp.eq.s32.totalorder %s30, 0
      %p341 = por %p339, %p340
      %s343 = sadd.s32 %s342, 1
      %p346 = scmp.eq.s32.totalorder %s24, 1
      %p347 = scmp.ne.s32.totalorder %s342, %s344
      %p348 = scmp.eq.s32.totalorder %s24, 0
      %p349 = por %p347, %p348
      %p350 = scmp.ne.s32.totalorder %s342, %s344
      %p351 = scmp.eq.s32.totalorder %s29, 1
      %p352 = por %p350, %p351
      %p353 = scmp.ne.s32.totalorder %s344, %s345
      %p354 = scmp.eq.s32.totalorder %s29, 0
      %p355 = por %p353, %p354
      %p356 = scmp.ne.s32.totalorder %s344, %s345
      %p357 = scmp.eq.s32.totalorder %s30, 1
      %p358 = por %p356, %p357
      %p360 = scmp.ne.s32.totalorder %s345, %s359
      %p361 = scmp.eq.s32.totalorder %s30, 0
      %p362 = por %p360, %p361
      %s364 = sadd.s32 %s363, 1
      %p367 = scmp.eq.s32.totalorder %s24, 1
      %p368 = scmp.ne.s32.totalorder %s363, %s365
      %p369 = scmp.eq.s32.totalorder %s24, 0
      %p370 = por %p368, %p369
      %p371 = scmp.ne.s32.totalorder %s363, %s365
      %p372 = scmp.eq.s32.totalorder %s29, 1
      %p373 = por %p371, %p372
      %p374 = scmp.ne.s32.totalorder %s365, %s366
      %p375 = scmp.eq.s32.totalorder %s29, 0
      %p376 = por %p374, %p375
      %p377 = scmp.ne.s32.totalorder %s365, %s366
      %p378 = scmp.eq.s32.totalorder %s30, 1
      %p379 = por %p377, %p378
      %p381 = scmp.ne.s32.totalorder %s366, %s380
      %p382 = scmp.eq.s32.totalorder %s30, 0
      %p383 = por %p381, %p382
      %s384 = ssub.s32 %s31, %s43
      %s385 = ssub.s32 %s32, %s39
      %s386 = sor.u32 %s384, %s385
      %p387 = scmp.eq.s32.totalorder %s386, 0
      %s389 = sadd.s32 %s388, 1
      %s390 = scalar_select %p387, %s388, %s389
      %p393 = pneg %p387
      %p394 = scmp.eq.s32.totalorder %s24, 1
      %p395 = por %p393, %p394
      %p396 = scmp.ne.s32.totalorder %s388, %s391
      %p397 = scmp.eq.s32.totalorder %s24, 0
      %p398 = por %p396, %p397
      %p399 = scmp.ne.s32.totalorder %s388, %s391
      %p400 = scmp.eq.s32.totalorder %s29, 1
      %p401 = por %p399, %p400
      %p402 = scmp.ne.s32.totalorder %s391, %s392
      %p403 = scmp.eq.s32.totalorder %s29, 0
      %p404 = por %p402, %p403
      %p405 = scmp.ne.s32.totalorder %s391, %s392
      %p406 = scmp.eq.s32.totalorder %s30, 1
      %p407 = por %p405, %p406
      %p409 = scmp.ne.s32.totalorder %s392, %s408
      %p410 = scmp.eq.s32.totalorder %s30, 0
      %p411 = por %p409, %p410
      %p412 = scmp.le.s32.totalorder 1, %s24
      %p413 = scmp.lt.s32.totalorder %s24, 3
      %p414 = pnand %p412, %p413
      %p415 = pneg %p414
      // Predicated region
      $region9: #{tpu_custom_call.1} parent=5 // pred_check
        _
      $region10: #{tpu_custom_call.1} parent=5 // pred_check_branch
        %417 = sbr.rel (%p414) target = $region12
      $region11: #{tpu_custom_call.1} parent=5 // pred_region
        %s418 = ssub.s32 %s24, 1
        // Predicated region
        $region13: #{tpu_custom_call.1} parent=11 // pred_check
          %p419 = pneg %p187
        $region14: #{tpu_custom_call.1} parent=11 // pred_check_branch
          %421 = sbr.rel (%p419) target = $region16
        $region15: #{tpu_custom_call.1} parent=11 // pred_region
          _
        $region16: #{tpu_custom_call.1} parent=11 // pred_fallthru
          _
        // Predicated region
        $region17: #{tpu_custom_call.1} parent=11 // pred_check
          %p422 = pneg %p208
        $region18: #{tpu_custom_call.1} parent=11 // pred_check_branch
          %424 = sbr.rel (%p422) target = $region20
        $region19: #{tpu_custom_call.1} parent=11 // pred_region
          _
        $region20: #{tpu_custom_call.1} parent=11 // pred_fallthru
          _
        // Predicated region
        $region21: #{tpu_custom_call.1} parent=11 // pred_check
          %p425 = pneg %p229
        $region22: #{tpu_custom_call.1} parent=11 // pred_check_branch
          %427 = sbr.rel (%p425) target = $region24
        $region23: #{tpu_custom_call.1} parent=11 // pred_region
          _
        $region24: #{tpu_custom_call.1} parent=11 // pred_fallthru
          _
        // Predicated region
        $region25: #{tpu_custom_call.1} parent=11 // pred_check
          %p428 = pneg %p250
        $region26: #{tpu_custom_call.1} parent=11 // pred_check_branch
          %430 = sbr.rel (%p428) target = $region28
        $region27: #{tpu_custom_call.1} parent=11 // pred_region
          _
        $region28: #{tpu_custom_call.1} parent=11 // pred_fallthru
          _
        // Predicated region
        $region29: #{tpu_custom_call.1} parent=11 // pred_check
          %p431 = pneg %p271
        $region30: #{tpu_custom_call.1} parent=11 // pred_check_branch
          %433 = sbr.rel (%p431) target = $region32
        $region31: #{tpu_custom_call.1} parent=11 // pred_region
          _
        $region32: #{tpu_custom_call.1} parent=11 // pred_fallthru
          _
        // Predicated region
        $region33: #{tpu_custom_call.1} parent=11 // pred_check
          %p434 = pneg %p292
        $region34: #{tpu_custom_call.1} parent=11 // pred_check_branch
          %436 = sbr.rel (%p434) target = $region36
        $region35: #{tpu_custom_call.1} parent=11 // pred_region
          _
        $region36: #{tpu_custom_call.1} parent=11 // pred_fallthru
          _
        // Predicated region
        $region37: #{tpu_custom_call.1} parent=11 // pred_check
          %p437 = pneg %p313
        $region38: #{tpu_custom_call.1} parent=11 // pred_check_branch
          %439 = sbr.rel (%p437) target = $region40
        $region39: #{tpu_custom_call.1} parent=11 // pred_region
          _
        $region40: #{tpu_custom_call.1} parent=11 // pred_fallthru
          _
        // Predicated region
        $region41: #{tpu_custom_call.1} parent=11 // pred_check
          %p440 = pneg %p334
        $region42: #{tpu_custom_call.1} parent=11 // pred_check_branch
          %442 = sbr.rel (%p440) target = $region44
        $region43: #{tpu_custom_call.1} parent=11 // pred_region
          _
        $region44: #{tpu_custom_call.1} parent=11 // pred_fallthru
          _
        // Predicated region
        $region45: #{tpu_custom_call.1} parent=11 // pred_check
          %p443 = pneg %p355
        $region46: #{tpu_custom_call.1} parent=11 // pred_check_branch
          %445 = sbr.rel (%p443) target = $region48
        $region47: #{tpu_custom_call.1} parent=11 // pred_region
          _
        $region48: #{tpu_custom_call.1} parent=11 // pred_fallthru
          _
        // Predicated region
        $region49: #{tpu_custom_call.1} parent=11 // pred_check
          %p446 = pneg %p376
        $region50: #{tpu_custom_call.1} parent=11 // pred_check_branch
          %448 = sbr.rel (%p446) target = $region52
        $region51: #{tpu_custom_call.1} parent=11 // pred_region
          _
        $region52: #{tpu_custom_call.1} parent=11 // pred_fallthru
          _
      $region12: #{tpu_custom_call.1} parent=5 // pred_fallthru
        _
      %p449 = scmp.lt.s32.totalorder %s24, 2
      // Predicated region
      $region53: #{tpu_custom_call.1} parent=5 // pred_check
        %p450 = pneg %p449
      $region54: #{tpu_custom_call.1} parent=5 // pred_check_branch
        %452 = sbr.rel (%p450) target = $region56
      $region55: #{tpu_custom_call.1} parent=5 // pred_region
        // Predicated region
        $region57: #{tpu_custom_call.1} parent=55 // pred_check
          %p453 = pneg %p56
        $region58: #{tpu_custom_call.1} parent=55 // pred_check_branch
          %455 = sbr.rel (%p453) target = $region60
        $region59: #{tpu_custom_call.1} parent=55 // pred_region
          %p456 = scmp.lt.s32.totalorder %s31, 1
          %s457 = scalar_select %p456, %s31, 1
          %s458 = smul.addr %s457, 8
          %s459 = scalar_lea.vmem %s0, %s458
        $region60: #{tpu_custom_call.1} parent=55 // pred_fallthru
          _
        // Predicated region
        $region61: #{tpu_custom_call.1} parent=55 // pred_check
          %p460 = pneg %p82
        $region62: #{tpu_custom_call.1} parent=55 // pred_check_branch
          %462 = sbr.rel (%p460) target = $region64
        $region63: #{tpu_custom_call.1} parent=55 // pred_region
          %p463 = scmp.lt.s32.totalorder %s31, 1
          %s464 = scalar_select %p463, %s31, 1
          %s465 = scalar_lea.vmem %s1, %s464
        $region64: #{tpu_custom_call.1} parent=55 // pred_fallthru
          _
        // Predicated region
        $region65: #{tpu_custom_call.1} parent=55 // pred_check
          %p466 = pneg %p108
        $region66: #{tpu_custom_call.1} parent=55 // pred_check_branch
          %468 = sbr.rel (%p466) target = $region68
        $region67: #{tpu_custom_call.1} parent=55 // pred_region
          %p469 = scmp.lt.s32.totalorder %s31, 1
          %s470 = scalar_select %p469, %s31, 1
          %s471 = scalar_lea.vmem %s2, %s470
        $region68: #{tpu_custom_call.1} parent=55 // pred_fallthru
          _
        // Predicated region
        $region69: #{tpu_custom_call.1} parent=55 // pred_check
          %p472 = pneg %p134
        $region70: #{tpu_custom_call.1} parent=55 // pred_check_branch
          %474 = sbr.rel (%p472) target = $region72
        $region71: #{tpu_custom_call.1} parent=55 // pred_region
          %p475 = scmp.lt.s32.totalorder %s31, 1
          %s476 = scalar_select %p475, %s31, 1
          %s477 = scalar_lea.vmem %s3, %s476
        $region72: #{tpu_custom_call.1} parent=55 // pred_fallthru
          _
        // Predicated region
        $region73: #{tpu_custom_call.1} parent=55 // pred_check
          %p478 = pneg %p160
        $region74: #{tpu_custom_call.1} parent=55 // pred_check_branch
          %480 = sbr.rel (%p478) target = $region76
        $region75: #{tpu_custom_call.1} parent=55 // pred_region
          %p481 = scmp.lt.s32.totalorder %s31, 1
          %s482 = scalar_select %p481, %s31, 1
          %s483 = scalar_lea.vmem %s4, %s482
        $region76: #{tpu_custom_call.1} parent=55 // pred_fallthru
          _
      $region56: #{tpu_custom_call.1} parent=5 // pred_fallthru
        _
      %p484 = scmp.le.s32.totalorder 1, %s24
      %p485 = scmp.lt.s32.totalorder %s24, 3
      %p486 = pnand %p484, %p485
      %p487 = pneg %p486
      // Predicated region
      $region77: #{tpu_custom_call.1} parent=5 // pred_check
        _
      $region78: #{tpu_custom_call.1} parent=5 // pred_check_branch
        %489 = sbr.rel (%p486) target = $region80
      $region79: #{tpu_custom_call.1} parent=5 // pred_region
        %s490 = ssub.s32 %s24, 1
        %p491 = scmp.lt.s32.totalorder %s33, 1
        %s492 = scalar_select %p491, %s33, 1
        %s493 = smul.addr %s492, 8
        %s494 = scalar_lea.vmem %s0, %s493
        %p495 = pneg %p62
        %p496 = pneg %p59
        %p497 = scmp.lt.s32.totalorder %s33, 1
        %s498 = scalar_select %p497, %s33, 1
        %s499 = scalar_lea.vmem %s1, %s498
        %p500 = pneg %p88
        %p501 = pneg %p85
        %p502 = scmp.lt.s32.totalorder %s33, 1
        %s503 = scalar_select %p502, %s33, 1
        %s504 = scalar_lea.vmem %s2, %s503
        %p505 = pneg %p114
        %p506 = pneg %p111
        %p507 = scmp.lt.s32.totalorder %s33, 1
        %s508 = scalar_select %p507, %s33, 1
        %s509 = scalar_lea.vmem %s3, %s508
        %p510 = pneg %p140
        %p511 = pneg %p137
        %p512 = scmp.lt.s32.totalorder %s33, 1
        %s513 = scalar_select %p512, %s33, 1
        %s514 = scalar_lea.vmem %s4, %s513
        %p515 = pneg %p166
        %p516 = pneg %p163
        %p517 = pneg %p187
        %p518 = pneg %p184
        %p519 = pneg %p208
        %p520 = pneg %p205
        %p521 = pneg %p229
        %p522 = pneg %p226
        %p523 = pneg %p250
        %p524 = pneg %p247
        %p525 = pneg %p271
        %p526 = pneg %p268
        %p527 = pneg %p292
        %p528 = pneg %p289
        %p529 = pneg %p313
        %p530 = pneg %p310
        %p531 = pneg %p334
        %p532 = pneg %p331
        %p533 = pneg %p355
        %p534 = pneg %p352
        %p535 = pneg %p376
        %p536 = pneg %p373
        %p537 = pneg %p404
        %p538 = pneg %p401
        %s539 = sand.u32 %s391, 1
        %s540 = scalar_lea.sflag [#allocation5], %s539
        %s541 = sand.u32 %s391, 1
        %s542 = smul.addr %s541, 8
        %s543 = scalar_lea.vmem [#allocation4], %s542
        %p544 = scmp.lt.s32.totalorder %s33, 1
        %s545 = scalar_select %p544, %s33, 1
        %s546 = smul.addr %s545, 8
        %s547 = scalar_lea.vmem %s0, %s546
        %p548 = scmp.lt.s32.totalorder %s33, 1
        %s549 = scalar_select %p548, %s33, 1
        %s550 = scalar_lea.vmem %s1, %s549
        %p551 = scmp.lt.s32.totalorder %s33, 1
        %s552 = scalar_select %p551, %s33, 1
        %s553 = scalar_lea.vmem %s2, %s552
        %p554 = scmp.lt.s32.totalorder %s33, 1
        %s555 = scalar_select %p554, %s33, 1
        %s556 = scalar_lea.vmem %s3, %s555
        %p557 = scmp.lt.s32.totalorder %s33, 1
        %s558 = scalar_select %p557, %s33, 1
        %s559 = scalar_lea.vmem %s4, %s558
        %p561 = scmp.eq.s32.totalorder %s34, 0
        // Predicated region
        $region81: #{tpu_custom_call.1} parent=79 // pred_check
          %p562 = pneg %p561
        $region82: #{tpu_custom_call.1} parent=79 // pred_check_branch
          %564 = sbr.rel (%p562) target = $region84
        $region83: #{tpu_custom_call.1} parent=79 // pred_region
          %v565 = vld [vmem:[%s547] sm:$0xff]
          %v566 = vld [vmem:[%s550] sm:$0x1]
          %v567 = vld [vmem:[%s553] sm:$0x1]
          %vm568 = vcmask 261120
          %v569 = vsel %vm568, %v565, 0.0
          %570 = vadd.xlane.f32.xlu0 %v569
          %v571 = vpop.xlane.xlu0 %570
          %v572 = vrcp.pop 32.0
          %v573 = vmul.f32 %v571, %v572
          %v574 = vsub.f32 %v565, %v573
          %v575 = vmul.f32 %v574, %v574
          %v576 = vsel %vm568, %v575, 0.0
          %577 = vadd.xlane.f32.xlu0 %v576
          %v578 = vpop.xlane.xlu0 %577
          %v579 = vmul.f32 %v578, %v572
          %v580 = vadd.f32 %v579, 1e-06
          %v581 = vrsqrt.pop %v580
          %v582 = vmul.f32 %v574, %v581
          %v584 = vlaneseq
          %v585 = vshrl.u32 %v584, 7
          %v586 = vsub.s32 0, %v585
          %v587 = vrot.slane %v566, %v586
          %v589 = vmul.f32 %v587, %v582
          %v591 = vlaneseq
          %v592 = vshrl.u32 %v591, 7
          %v593 = vsub.s32 0, %v592
          %v594 = vrot.slane %v567, %v593
          %v596 = vadd.f32 %v589, %v594
          %v597 = vpack.c.bf16 %v596, %v596
          %v598 = vld [vmem:[%s7] sm:$0xf]
          %v599 = vld [vmem:[%s7 + $0x4] sm:$0xf]
          %v600 = vld [vmem:[%s7 + $0x8] sm:$0xf]
          %v601 = vld [vmem:[%s7 + $0xc] sm:$0xf]
          %v602 = vld [vmem:[%s8] sm:$0x1]
          %v604 = vlaneseq
          %v605 = vshrl.u32 %v604, 7
          %v606 = vsub.s32 0, %v605
          %v607 = vrot.slane %v602, %v606
          %v613 = vunpack.c.l.b16 %v598
          %v614 = vunpack.c.l.b16 %v599
          %v615 = vunpack.c.l.b16 %v600
          %v616 = vunpack.c.l.b16 %v601
          %v617 = vpack.c.b16 %v614, %v613
          %v618 = vpack.c.b16 %v616, %v615
          %v622 = vsel %vm568, %v597, 0
          %624 = vmatprep.subr.bf16.mxu0 0
          %625 = vmatpush1.bf16.msra.mxu0 %v617
          %626 = vmatprep.subr.bf16.mxu0 0
          %627 = vmatpush1.bf16.msra.mxu0 %v618
          %628 = vmatprep.subr.bf16.mxu0 0
          %629 = vmatpush1.bf16.msra.mxu0 0
          %630 = vmatprep.subr.bf16.mxu0 0
          %631 = vmatpush1.bf16.msra.mxu0 0
          %632 = vmatprep.subr.bf16.mxu0 0
          %633 = vmatpush1.bf16.msra.mxu0 0
          %634 = vmatprep.subr.bf16.mxu0 0
          %635 = vmatpush1.bf16.msra.mxu0 0
          %636 = vmatprep.subr.bf16.mxu0 0
          %637 = vmatpush1.bf16.msra.mxu0 0
          %638 = vmatprep.subr.bf16.mxu0 0
          %639 = vmatpush1.bf16.msra.mxu0 0
          %640 = vmatprep.subr.bf16.mxu0 0
          %641 = vmatpush1.bf16.msra.mxu0 0
          %642 = vmatprep.subr.bf16.mxu0 0
          %643 = vmatpush1.bf16.msra.mxu0 0
          %644 = vmatprep.subr.bf16.mxu0 0
          %645 = vmatpush1.bf16.msra.mxu0 0
          %646 = vmatprep.subr.bf16.mxu0 0
          %647 = vmatpush1.bf16.msra.mxu0 0
          %648 = vmatprep.subr.bf16.mxu0 0
          %649 = vmatpush1.bf16.msra.mxu0 0
          %650 = vmatprep.subr.bf16.mxu0 0
          %651 = vmatpush1.bf16.msra.mxu0 0
          %652 = vmatprep.subr.bf16.mxu0 0
          %653 = vmatpush1.bf16.msra.mxu0 0
          %654 = vmatprep.subr.bf16.mxu0 0
          %655 = vmatpush1.bf16.msra.mxu0 0
          %656 = vmatprep.mubr.bf16.mxu0 0
          %657 = vmatmul.mubr.bf16.gmra.mrb[0].mxu0 %v622
          %v658 = vpop.f32.mrb[0].mxu0
          %v659 = vadd.f32 %v607, %v658
          %v660 = vpop.f32.mrb[0].mxu0
          %v661 = vpop.f32.mrb[0].mxu0
          %v662 = vpop.f32.mrb[0].mxu0
          %663 = vdwg.mxu0
          %v664 = vpack.c.bf16 %v659, %v659
          %665 = vxpose.xlu0.c.b16.start [1/8] %v664, 128
          %666 = vxpose.xlu0.c.b16.cont [2/8] 0, 128
          %667 = vxpose.xlu0.c.b16.cont [3/8] 0, 128
          %668 = vxpose.xlu0.c.b16.cont [4/8] 0, 128
          %669 = vxpose.xlu0.c.b16.cont [5/8] 0, 128
          %670 = vxpose.xlu0.c.b16.cont [6/8] 0, 128
          %671 = vxpose.xlu0.c.b16.cont [7/8] 0, 128
          %672 = vxpose.xlu0.c.b16.end [8/8] 0, 128
          %v673 = vpop.trf.xlu0
          %v674 = vpop.trf.xlu0
          %v675 = vpop.trf.xlu0
          %v676 = vpop.trf.xlu0
          %v677 = vpop.trf.xlu0
          %v678 = vpop.trf.xlu0
          %v679 = vpop.trf.xlu0
          %v680 = vpop.trf.xlu0
          %vm681 = vcmask 64512
          %682 = vst.msk [vmem:[#allocation2] sm:$0xff] %vm681, %v673
          %683 = vst.msk [vmem:[#allocation2 + $0x8] sm:$0xff] %vm681, %v674
          %v685 = vunpack.c.l.b16 %v664
          %v686 = vpack.c.b16 %v685, %v685
          %687 = vrot.lane.b32.xlu0 %v686, 96
          %v688 = vpop.permute.xlu0 %687
          %vm690 = vcmask 257024
          %691 = vst.msk [vmem:[#allocation3] sm:$0xf] %vm690, %v688
        $region84: #{tpu_custom_call.1} parent=79 // pred_fallthru
          _
        %s692 = smul.u32 %s34, 8
        %s693 = scalar_lea.vmem %s547, %s692
        %v694 = vld [vmem:[%s693] sm:$0xff]
        %v695 = vld [vmem:[%s550] sm:$0x1]
        %v696 = vld [vmem:[%s553] sm:$0x1]
        %vm697 = vcmask 261120
        %v698 = vsel %vm697, %v694, 0.0
        %699 = vadd.xlane.f32.xlu0 %v698
        %v700 = vpop.xlane.xlu0 %699
        %v701 = vrcp.pop 32.0
        %v702 = vmul.f32 %v700, %v701
        %v703 = vsub.f32 %v694, %v702
        %v704 = vmul.f32 %v703, %v703
        %v705 = vsel %vm697, %v704, 0.0
        %706 = vadd.xlane.f32.xlu0 %v705
        %v707 = vpop.xlane.xlu0 %706
        %v708 = vmul.f32 %v707, %v701
        %v709 = vadd.f32 %v708, 1e-06
        %v710 = vrsqrt.pop %v709
        %v711 = vmul.f32 %v703, %v710
        %v713 = vlaneseq
        %v714 = vshrl.u32 %v713, 7
        %v715 = vsub.s32 0, %v714
        %v716 = vrot.slane %v695, %v715
        %v718 = vmul.f32 %v716, %v711
        %v720 = vlaneseq
        %v721 = vshrl.u32 %v720, 7
        %v722 = vsub.s32 0, %v721
        %v723 = vrot.slane %v696, %v722
        %v725 = vadd.f32 %v718, %v723
        %v726 = vpack.c.bf16 %v725, %v725
        %v727 = vld [vmem:[%s5] sm:$0xf]
        %v728 = vld [vmem:[%s5 + $0x4] sm:$0xf]
        %v729 = vld [vmem:[%s5 + $0x8] sm:$0xf]
        %v730 = vld [vmem:[%s5 + $0xc] sm:$0xf]
        %v731 = vld [vmem:[%s6] sm:$0x1]
        %v733 = vlaneseq
        %v734 = vshrl.u32 %v733, 7
        %v735 = vsub.s32 0, %v734
        %v736 = vrot.slane %v731, %v735
        %v742 = vunpack.c.l.b16 %v727
        %v743 = vunpack.c.l.b16 %v728
        %v744 = vunpack.c.l.b16 %v729
        %v745 = vunpack.c.l.b16 %v730
        %v746 = vpack.c.b16 %v743, %v742
        %v747 = vpack.c.b16 %v745, %v744
        %v751 = vsel %vm697, %v726, 0
        %753 = vmatprep.subr.bf16.mxu0 0
        %754 = vmatpush1.bf16.msra.mxu0 %v746
        %755 = vmatprep.subr.bf16.mxu0 0
        %756 = vmatpush1.bf16.msra.mxu0 %v747
        %757 = vmatprep.subr.bf16.mxu0 0
        %758 = vmatpush1.bf16.msra.mxu0 0
        %759 = vmatprep.subr.bf16.mxu0 0
        %760 = vmatpush1.bf16.msra.mxu0 0
        %761 = vmatprep.subr.bf16.mxu0 0
        %762 = vmatpush1.bf16.msra.mxu0 0
        %763 = vmatprep.subr.bf16.mxu0 0
        %764 = vmatpush1.bf16.msra.mxu0 0
        %765 = vmatprep.subr.bf16.mxu0 0
        %766 = vmatpush1.bf16.msra.mxu0 0
        %767 = vmatprep.subr.bf16.mxu0 0
        %768 = vmatpush1.bf16.msra.mxu0 0
        %769 = vmatprep.subr.bf16.mxu0 0
        %770 = vmatpush1.bf16.msra.mxu0 0
        %771 = vmatprep.subr.bf16.mxu0 0
        %772 = vmatpush1.bf16.msra.mxu0 0
        %773 = vmatprep.subr.bf16.mxu0 0
        %774 = vmatpush1.bf16.msra.mxu0 0
        %775 = vmatprep.subr.bf16.mxu0 0
        %776 = vmatpush1.bf16.msra.mxu0 0
        %777 = vmatprep.subr.bf16.mxu0 0
        %778 = vmatpush1.bf16.msra.mxu0 0
        %779 = vmatprep.subr.bf16.mxu0 0
        %780 = vmatpush1.bf16.msra.mxu0 0
        %781 = vmatprep.subr.bf16.mxu0 0
        %782 = vmatpush1.bf16.msra.mxu0 0
        %783 = vmatprep.subr.bf16.mxu0 0
        %784 = vmatpush1.bf16.msra.mxu0 0
        %785 = vmatprep.mubr.bf16.mxu0 0
        %786 = vmatmul.mubr.bf16.gmra.mrb[0].mxu0 %v751
        %v787 = vpop.f32.mrb[0].mxu0
        %v788 = vadd.f32 %v736, %v787
        %v789 = vpop.f32.mrb[0].mxu0
        %v790 = vpop.f32.mrb[0].mxu0
        %v791 = vpop.f32.mrb[0].mxu0
        %792 = vdwg.mxu0
        %v793 = vmul.f32 %v788, 0.5
        %v794 = vpack.c.bf16 %v793, %v793
        %v795 = vld [vmem:[#allocation2] sm:$0x3]
        %v796 = vld [vmem:[#allocation3] sm:$0xf]
        %vm797 = vcmask 31744
        %v799 = vsel %vm797, %v794, 0
        %vm801 = vcmask 1041408
        %v803 = vsel %vm801, %v795, 0
        %805 = vmatprep.subr.bf16.mxu0 0
        %806 = vmatpush1.bf16.msra.mxu0 %v803
        %807 = vmatprep.subr.bf16.mxu0 0
        %808 = vmatpush1.bf16.msra.mxu0 0
        %809 = vmatprep.subr.bf16.mxu0 0
        %810 = vmatpush1.bf16.msra.mxu0 0
        %811 = vmatprep.subr.bf16.mxu0 0
        %812 = vmatpush1.bf16.msra.mxu0 0
        %813 = vmatprep.subr.bf16.mxu0 0
        %814 = vmatpush1.bf16.msra.mxu0 0
        %815 = vmatprep.subr.bf16.mxu0 0
        %816 = vmatpush1.bf16.msra.mxu0 0
        %817 = vmatprep.subr.bf16.mxu0 0
        %818 = vmatpush1.bf16.msra.mxu0 0
        %819 = vmatprep.subr.bf16.mxu0 0
        %820 = vmatpush1.bf16.msra.mxu0 0
        %821 = vmatprep.subr.bf16.mxu0 0
        %822 = vmatpush1.bf16.msra.mxu0 0
        %823 = vmatprep.subr.bf16.mxu0 0
        %824 = vmatpush1.bf16.msra.mxu0 0
        %825 = vmatprep.subr.bf16.mxu0 0
        %826 = vmatpush1.bf16.msra.mxu0 0
        %827 = vmatprep.subr.bf16.mxu0 0
        %828 = vmatpush1.bf16.msra.mxu0 0
        %829 = vmatprep.subr.bf16.mxu0 0
        %830 = vmatpush1.bf16.msra.mxu0 0
        %831 = vmatprep.subr.bf16.mxu0 0
        %832 = vmatpush1.bf16.msra.mxu0 0
        %833 = vmatprep.subr.bf16.mxu0 0
        %834 = vmatpush1.bf16.msra.mxu0 0
        %835 = vmatprep.subr.bf16.mxu0 0
        %836 = vmatpush1.bf16.msra.mxu0 0
        %837 = vmatprep.mubr.bf16.mxu0 0
        %838 = vmatmul.mubr.bf16.gmra.mrb[0].mxu0 %v799
        %v839 = vpop.f32.mrb[0].mxu0
        %v840 = vadd.f32 0.0, %v839
        %v841 = vpop.f32.mrb[0].mxu0
        %v842 = vpop.f32.mrb[0].mxu0
        %v843 = vpop.f32.mrb[0].mxu0
        %844 = vdwg.mxu0
        %vm845 = vcmask 64512
        %v846 = vsel %vm845, %v840, -inf
        %847 = vmax.xlane.f32.xlu0 %v846
        %v848 = vpop.xlane.xlu0 %847
        %v849 = vsub.f32 %v840, %v848
        %v850 = vmul.f32 %v849, 1.442695
        %v851 = vpow.pop %v850
        %v852 = vsel %vm845, %v851, 0.0
        %853 = vadd.xlane.f32.xlu0 %v852
        %v854 = vpop.xlane.xlu0 %853
        %v855 = vpack.c.bf16 %v851, %v851
        %v857 = vsel %vm845, %v855, 0
        %vm859 = vcmask 1043456
        %v861 = vsel %vm859, %v796, 0
        %863 = vmatprep.subr.bf16.mxu0 0
        %864 = vmatpush1.bf16.msra.mxu0 %v861
        %865 = vmatprep.subr.bf16.mxu0 0
        %866 = vmatpush1.bf16.msra.mxu0 0
        %867 = vmatprep.subr.bf16.mxu0 0
        %868 = vmatpush1.bf16.msra.mxu0 0
        %869 = vmatprep.subr.bf16.mxu0 0
        %870 = vmatpush1.bf16.msra.mxu0 0
        %871 = vmatprep.subr.bf16.mxu0 0
        %872 = vmatpush1.bf16.msra.mxu0 0
        %873 = vmatprep.subr.bf16.mxu0 0
        %874 = vmatpush1.bf16.msra.mxu0 0
        %875 = vmatprep.subr.bf16.mxu0 0
        %876 = vmatpush1.bf16.msra.mxu0 0
        %877 = vmatprep.subr.bf16.mxu0 0
        %878 = vmatpush1.bf16.msra.mxu0 0
        %879 = vmatprep.subr.bf16.mxu0 0
        %880 = vmatpush1.bf16.msra.mxu0 0
        %881 = vmatprep.subr.bf16.mxu0 0
        %882 = vmatpush1.bf16.msra.mxu0 0
        %883 = vmatprep.subr.bf16.mxu0 0
        %884 = vmatpush1.bf16.msra.mxu0 0
        %885 = vmatprep.subr.bf16.mxu0 0
        %886 = vmatpush1.bf16.msra.mxu0 0
        %887 = vmatprep.subr.bf16.mxu0 0
        %888 = vmatpush1.bf16.msra.mxu0 0
        %889 = vmatprep.subr.bf16.mxu0 0
        %890 = vmatpush1.bf16.msra.mxu0 0
        %891 = vmatprep.subr.bf16.mxu0 0
        %892 = vmatpush1.bf16.msra.mxu0 0
        %893 = vmatprep.subr.bf16.mxu0 0
        %894 = vmatpush1.bf16.msra.mxu0 0
        %895 = vmatprep.mubr.bf16.mxu0 0
        %896 = vmatmul.mubr.bf16.gmra.mrb[0].mxu0 %v857
        %v897 = vpop.f32.mrb[0].mxu0
        %v898 = vadd.f32 0.0, %v897
        %v899 = vpop.f32.mrb[0].mxu0
        %v900 = vpop.f32.mrb[0].mxu0
        %v901 = vpop.f32.mrb[0].mxu0
        %902 = vdwg.mxu0
        %v903 = vrcp.pop %v854
        %v904 = vmul.f32 %v898, %v903
        %v905 = vpack.c.bf16 %v904, %v904
        %v906 = vld [vmem:[#allocation2] sm:$0xc]
        %908 = vrot.lane.b32.xlu0 %v794, 124
        %v909 = vpop.permute.xlu0 %908
        %v911 = vrot.slane %v906, 2
        %v913 = vsel %vm797, %v909, 0
        %v916 = vsel %vm801, %v911, 0
        %918 = vmatprep.subr.bf16.mxu0 0
        %919 = vmatpush1.bf16.msra.mxu0 %v916
        %920 = vmatprep.subr.bf16.mxu0 0
        %921 = vmatpush1.bf16.msra.mxu0 0
        %922 = vmatprep.subr.bf16.mxu0 0
        %923 = vmatpush1.bf16.msra.mxu0 0
        %924 = vmatprep.subr.bf16.mxu0 0
        %925 = vmatpush1.bf16.msra.mxu0 0
        %926 = vmatprep.subr.bf16.mxu0 0
        %927 = vmatpush1.bf16.msra.mxu0 0
        %928 = vmatprep.subr.bf16.mxu0 0
        %929 = vmatpush1.bf16.msra.mxu0 0
        %930 = vmatprep.subr.bf16.mxu0 0
        %931 = vmatpush1.bf16.msra.mxu0 0
        %932 = vmatprep.subr.bf16.mxu0 0
        %933 = vmatpush1.bf16.msra.mxu0 0
        %934 = vmatprep.subr.bf16.mxu0 0
        %935 = vmatpush1.bf16.msra.mxu0 0
        %936 = vmatprep.subr.bf16.mxu0 0
        %937 = vmatpush1.bf16.msra.mxu0 0
        %938 = vmatprep.subr.bf16.mxu0 0
        %939 = vmatpush1.bf16.msra.mxu0 0
        %940 = vmatprep.subr.bf16.mxu0 0
        %941 = vmatpush1.bf16.msra.mxu0 0
        %942 = vmatprep.subr.bf16.mxu0 0
        %943 = vmatpush1.bf16.msra.mxu0 0
        %944 = vmatprep.subr.bf16.mxu0 0
        %945 = vmatpush1.bf16.msra.mxu0 0
        %946 = vmatprep.subr.bf16.mxu0 0
        %947 = vmatpush1.bf16.msra.mxu0 0
        %948 = vmatprep.subr.bf16.mxu0 0
        %949 = vmatpush1.bf16.msra.mxu0 0
        %950 = vmatprep.mubr.bf16.mxu0 0
        %951 = vmatmul.mubr.bf16.gmra.mrb[0].mxu0 %v913
        %v952 = vpop.f32.mrb[0].mxu0
        %v953 = vadd.f32 0.0, %v952
        %v954 = vpop.f32.mrb[0].mxu0
        %v955 = vpop.f32.mrb[0].mxu0
        %v956 = vpop.f32.mrb[0].mxu0
        %957 = vdwg.mxu0
        %v958 = vsel %vm845, %v953, -inf
        %959 = vmax.xlane.f32.xlu0 %v958
        %v960 = vpop.xlane.xlu0 %959
        %v961 = vsub.f32 %v953, %v960
        %v962 = vmul.f32 %v961, 1.442695
        %v963 = vpow.pop %v962
        %v964 = vsel %vm845, %v963, 0.0
        %965 = vadd.xlane.f32.xlu0 %v964
        %v966 = vpop.xlane.xlu0 %965
        %v967 = vpack.c.bf16 %v963, %v963
        %v969 = vunpack.c.l.b16 %v796
        %v970 = vpack.c.b16 %v969, %v969
        %971 = vrot.lane.b32.xlu0 %v970, 124
        %v972 = vpop.permute.xlu0 %971
        %v974 = vsel %vm845, %v967, 0
        %v977 = vsel %vm859, %v972, 0
        %979 = vmatprep.subr.bf16.mxu0 0
        %980 = vmatpush1.bf16.msra.mxu0 %v977
        %981 = vmatprep.subr.bf16.mxu0 0
        %982 = vmatpush1.bf16.msra.mxu0 0
        %983 = vmatprep.subr.bf16.mxu0 0
        %984 = vmatpush1.bf16.msra.mxu0 0
        %985 = vmatprep.subr.bf16.mxu0 0
        %986 = vmatpush1.bf16.msra.mxu0 0
        %987 = vmatprep.subr.bf16.mxu0 0
        %988 = vmatpush1.bf16.msra.mxu0 0
        %989 = vmatprep.subr.bf16.mxu0 0
        %990 = vmatpush1.bf16.msra.mxu0 0
        %991 = vmatprep.subr.bf16.mxu0 0
        %992 = vmatpush1.bf16.msra.mxu0 0
        %993 = vmatprep.subr.bf16.mxu0 0
        %994 = vmatpush1.bf16.msra.mxu0 0
        %995 = vmatprep.subr.bf16.mxu0 0
        %996 = vmatpush1.bf16.msra.mxu0 0
        %997 = vmatprep.subr.bf16.mxu0 0
        %998 = vmatpush1.bf16.msra.mxu0 0
        %999 = vmatprep.subr.bf16.mxu0 0
        %1000 = vmatpush1.bf16.msra.mxu0 0
        %1001 = vmatprep.subr.bf16.mxu0 0
        %1002 = vmatpush1.bf16.msra.mxu0 0
        %1003 = vmatprep.subr.bf16.mxu0 0
        %1004 = vmatpush1.bf16.msra.mxu0 0
        %1005 = vmatprep.subr.bf16.mxu0 0
        %1006 = vmatpush1.bf16.msra.mxu0 0
        %1007 = vmatprep.subr.bf16.mxu0 0
        %1008 = vmatpush1.bf16.msra.mxu0 0
        %1009 = vmatprep.subr.bf16.mxu0 0
        %1010 = vmatpush1.bf16.msra.mxu0 0
        %1011 = vmatprep.mubr.bf16.mxu0 0
        %1012 = vmatmul.mubr.bf16.gmra.mrb[0].mxu0 %v974
        %v1013 = vpop.f32.mrb[0].mxu0
        %v1014 = vadd.f32 0.0, %v1013
        %v1015 = vpop.f32.mrb[0].mxu0
        %v1016 = vpop.f32.mrb[0].mxu0
        %v1017 = vpop.f32.mrb[0].mxu0
        %1018 = vdwg.mxu0
        %v1019 = vrcp.pop %v966
        %v1020 = vmul.f32 %v1014, %v1019
        %v1021 = vpack.c.bf16 %v1020, %v1020
        %v1022 = vld [vmem:[#allocation2] sm:$0x30]
        %1023 = vrot.lane.b32.xlu0 %v794, 120
        %v1024 = vpop.permute.xlu0 %1023
        %v1026 = vrot.slane %v1022, 4
        %v1028 = vsel %vm797, %v1024, 0
        %v1031 = vsel %vm801, %v1026, 0
        %1033 = vmatprep.subr.bf16.mxu0 0
        %1034 = vmatpush1.bf16.msra.mxu0 %v1031
        %1035 = vmatprep.subr.bf16.mxu0 0
        %1036 = vmatpush1.bf16.msra.mxu0 0
        %1037 = vmatprep.subr.bf16.mxu0 0
        %1038 = vmatpush1.bf16.msra.mxu0 0
        %1039 = vmatprep.subr.bf16.mxu0 0
        %1040 = vmatpush1.bf16.msra.mxu0 0
        %1041 = vmatprep.subr.bf16.mxu0 0
        %1042 = vmatpush1.bf16.msra.mxu0 0
        %1043 = vmatprep.subr.bf16.mxu0 0
        %1044 = vmatpush1.bf16.msra.mxu0 0
        %1045 = vmatprep.subr.bf16.mxu0 0
        %1046 = vmatpush1.bf16.msra.mxu0 0
        %1047 = vmatprep.subr.bf16.mxu0 0
        %1048 = vmatpush1.bf16.msra.mxu0 0
        %1049 = vmatprep.subr.bf16.mxu0 0
        %1050 = vmatpush1.bf16.msra.mxu0 0
        %1051 = vmatprep.subr.bf16.mxu0 0
        %1052 = vmatpush1.bf16.msra.mxu0 0
        %1053 = vmatprep.subr.bf16.mxu0 0
        %1054 = vmatpush1.bf16.msra.mxu0 0
        %1055 = vmatprep.subr.bf16.mxu0 0
        %1056 = vmatpush1.bf16.msra.mxu0 0
        %1057 = vmatprep.subr.bf16.mxu0 0
        %1058 = vmatpush1.bf16.msra.mxu0 0
        %1059 = vmatprep.subr.bf16.mxu0 0
        %1060 = vmatpush1.bf16.msra.mxu0 0
        %1061 = vmatprep.subr.bf16.mxu0 0
        %1062 = vmatpush1.bf16.msra.mxu0 0
        %1063 = vmatprep.subr.bf16.mxu0 0
        %1064 = vmatpush1.bf16.msra.mxu0 0
        %1065 = vmatprep.mubr.bf16.mxu0 0
        %1066 = vmatmul.mubr.bf16.gmra.mrb[0].mxu0 %v1028
        %v1067 = vpop.f32.mrb[0].mxu0
        %v1068 = vadd.f32 0.0, %v1067
        %v1069 = vpop.f32.mrb[0].mxu0
        %v1070 = vpop.f32.mrb[0].mxu0
        %v1071 = vpop.f32.mrb[0].mxu0
        %1072 = vdwg.mxu0
        %v1073 = vsel %vm845, %v1068, -inf
        %1074 = vmax.xlane.f32.xlu0 %v1073
        %v1075 = vpop.xlane.xlu0 %1074
        %v1076 = vsub.f32 %v1068, %v1075
        %v1077 = vmul.f32 %v1076, 1.442695
        %v1078 = vpow.pop %v1077
        %v1079 = vsel %vm845, %v1078, 0.0
        %1080 = vadd.xlane.f32.xlu0 %v1079
        %v1081 = vpop.xlane.xlu0 %1080
        %v1082 = vpack.c.bf16 %v1078, %v1078
        %1083 = vrot.lane.b32.xlu0 %v970, 120
        %v1084 = vpop.permute.xlu0 %1083
        %v1086 = vsel %vm845, %v1082, 0
        %v1089 = vsel %vm859, %v1084, 0
        %1091 = vmatprep.subr.bf16.mxu0 0
        %1092 = vmatpush1.bf16.msra.mxu0 %v1089
        %1093 = vmatprep.subr.bf16.mxu0 0
        %1094 = vmatpush1.bf16.msra.mxu0 0
        %1095 = vmatprep.subr.bf16.mxu0 0
        %1096 = vmatpush1.bf16.msra.mxu0 0
        %1097 = vmatprep.subr.bf16.mxu0 0
        %1098 = vmatpush1.bf16.msra.mxu0 0
        %1099 = vmatprep.subr.bf16.mxu0 0
        %1100 = vmatpush1.bf16.msra.mxu0 0
        %1101 = vmatprep.subr.bf16.mxu0 0
        %1102 = vmatpush1.bf16.msra.mxu0 0
        %1103 = vmatprep.subr.bf16.mxu0 0
        %1104 = vmatpush1.bf16.msra.mxu0 0
        %1105 = vmatprep.subr.bf16.mxu0 0
        %1106 = vmatpush1.bf16.msra.mxu0 0
        %1107 = vmatprep.subr.bf16.mxu0 0
        %1108 = vmatpush1.bf16.msra.mxu0 0
        %1109 = vmatprep.subr.bf16.mxu0 0
        %1110 = vmatpush1.bf16.msra.mxu0 0
        %1111 = vmatprep.subr.bf16.mxu0 0
        %1112 = vmatpush1.bf16.msra.mxu0 0
        %1113 = vmatprep.subr.bf16.mxu0 0
        %1114 = vmatpush1.bf16.msra.mxu0 0
        %1115 = vmatprep.subr.bf16.mxu0 0
        %1116 = vmatpush1.bf16.msra.mxu0 0
        %1117 = vmatprep.subr.bf16.mxu0 0
        %1118 = vmatpush1.bf16.msra.mxu0 0
        %1119 = vmatprep.subr.bf16.mxu0 0
        %1120 = vmatpush1.bf16.msra.mxu0 0
        %1121 = vmatprep.subr.bf16.mxu0 0
        %1122 = vmatpush1.bf16.msra.mxu0 0
        %1123 = vmatprep.mubr.bf16.mxu0 0
        %1124 = vmatmul.mubr.bf16.gmra.mrb[0].mxu0 %v1086
        %v1125 = vpop.f32.mrb[0].mxu0
        %v1126 = vadd.f32 0.0, %v1125
        %v1127 = vpop.f32.mrb[0].mxu0
        %v1128 = vpop.f32.mrb[0].mxu0
        %v1129 = vpop.f32.mrb[0].mxu0
        %1130 = vdwg.mxu0
        %v1131 = vrcp.pop %v1081
        %v1132 = vmul.f32 %v1126, %v1131
        %v1133 = vpack.c.bf16 %v1132, %v1132
        %v1134 = vld [vmem:[#allocation2] sm:$0xc0]
        %1135 = vrot.lane.b32.xlu0 %v794, 116
        %v1136 = vpop.permute.xlu0 %1135
        %v1138 = vrot.slane %v1134, 6
        %v1140 = vsel %vm797, %v1136, 0
        %v1143 = vsel %vm801, %v1138, 0
        %1145 = vmatprep.subr.bf16.mxu0 0
        %1146 = vmatpush1.bf16.msra.mxu0 %v1143
        %1147 = vmatprep.subr.bf16.mxu0 0
        %1148 = vmatpush1.bf16.msra.mxu0 0
        %1149 = vmatprep.subr.bf16.mxu0 0
        %1150 = vmatpush1.bf16.msra.mxu0 0
        %1151 = vmatprep.subr.bf16.mxu0 0
        %1152 = vmatpush1.bf16.msra.mxu0 0
        %1153 = vmatprep.subr.bf16.mxu0 0
        %1154 = vmatpush1.bf16.msra.mxu0 0
        %1155 = vmatprep.subr.bf16.mxu0 0
        %1156 = vmatpush1.bf16.msra.mxu0 0
        %1157 = vmatprep.subr.bf16.mxu0 0
        %1158 = vmatpush1.bf16.msra.mxu0 0
        %1159 = vmatprep.subr.bf16.mxu0 0
        %1160 = vmatpush1.bf16.msra.mxu0 0
        %1161 = vmatprep.subr.bf16.mxu0 0
        %1162 = vmatpush1.bf16.msra.mxu0 0
        %1163 = vmatprep.subr.bf16.mxu0 0
        %1164 = vmatpush1.bf16.msra.mxu0 0
        %1165 = vmatprep.subr.bf16.mxu0 0
        %1166 = vmatpush1.bf16.msra.mxu0 0
        %1167 = vmatprep.subr.bf16.mxu0 0
        %1168 = vmatpush1.bf16.msra.mxu0 0
        %1169 = vmatprep.subr.bf16.mxu0 0
        %1170 = vmatpush1.bf16.msra.mxu0 0
        %1171 = vmatprep.subr.bf16.mxu0 0
        %1172 = vmatpush1.bf16.msra.mxu0 0
        %1173 = vmatprep.subr.bf16.mxu0 0
        %1174 = vmatpush1.bf16.msra.mxu0 0
        %1175 = vmatprep.subr.bf16.mxu0 0
        %1176 = vmatpush1.bf16.msra.mxu0 0
        %1177 = vmatprep.mubr.bf16.mxu0 0
        %1178 = vmatmul.mubr.bf16.gmra.mrb[0].mxu0 %v1140
        %v1179 = vpop.f32.mrb[0].mxu0
        %v1180 = vadd.f32 0.0, %v1179
        %v1181 = vpop.f32.mrb[0].mxu0
        %v1182 = vpop.f32.mrb[0].mxu0
        %v1183 = vpop.f32.mrb[0].mxu0
        %1184 = vdwg.mxu0
        %v1185 = vsel %vm845, %v1180, -inf
        %1186 = vmax.xlane.f32.xlu0 %v1185
        %v1187 = vpop.xlane.xlu0 %1186
        %v1188 = vsub.f32 %v1180, %v1187
        %v1189 = vmul.f32 %v1188, 1.442695
        %v1190 = vpow.pop %v1189
        %v1191 = vsel %vm845, %v1190, 0.0
        %1192 = vadd.xlane.f32.xlu0 %v1191
        %v1193 = vpop.xlane.xlu0 %1192
        %v1194 = vpack.c.bf16 %v1190, %v1190
        %1195 = vrot.lane.b32.xlu0 %v970, 116
        %v1196 = vpop.permute.xlu0 %1195
        %v1198 = vsel %vm845, %v1194, 0
        %v1201 = vsel %vm859, %v1196, 0
        %1203 = vmatprep.subr.bf16.mxu0 0
        %1204 = vmatpush1.bf16.msra.mxu0 %v1201
        %1205 = vmatprep.subr.bf16.mxu0 0
        %1206 = vmatpush1.bf16.msra.mxu0 0
        %1207 = vmatprep.subr.bf16.mxu0 0
        %1208 = vmatpush1.bf16.msra.mxu0 0
        %1209 = vmatprep.subr.bf16.mxu0 0
        %1210 = vmatpush1.bf16.msra.mxu0 0
        %1211 = vmatprep.subr.bf16.mxu0 0
        %1212 = vmatpush1.bf16.msra.mxu0 0
        %1213 = vmatprep.subr.bf16.mxu0 0
        %1214 = vmatpush1.bf16.msra.mxu0 0
        %1215 = vmatprep.subr.bf16.mxu0 0
        %1216 = vmatpush1.bf16.msra.mxu0 0
        %1217 = vmatprep.subr.bf16.mxu0 0
        %1218 = vmatpush1.bf16.msra.mxu0 0
        %1219 = vmatprep.subr.bf16.mxu0 0
        %1220 = vmatpush1.bf16.msra.mxu0 0
        %1221 = vmatprep.subr.bf16.mxu0 0
        %1222 = vmatpush1.bf16.msra.mxu0 0
        %1223 = vmatprep.subr.bf16.mxu0 0
        %1224 = vmatpush1.bf16.msra.mxu0 0
        %1225 = vmatprep.subr.bf16.mxu0 0
        %1226 = vmatpush1.bf16.msra.mxu0 0
        %1227 = vmatprep.subr.bf16.mxu0 0
        %1228 = vmatpush1.bf16.msra.mxu0 0
        %1229 = vmatprep.subr.bf16.mxu0 0
        %1230 = vmatpush1.bf16.msra.mxu0 0
        %1231 = vmatprep.subr.bf16.mxu0 0
        %1232 = vmatpush1.bf16.msra.mxu0 0
        %1233 = vmatprep.subr.bf16.mxu0 0
        %1234 = vmatpush1.bf16.msra.mxu0 0
        %1235 = vmatprep.mubr.bf16.mxu0 0
        %1236 = vmatmul.mubr.bf16.gmra.mrb[0].mxu0 %v1198
        %v1237 = vpop.f32.mrb[0].mxu0
        %v1238 = vadd.f32 0.0, %v1237
        %v1239 = vpop.f32.mrb[0].mxu0
        %v1240 = vpop.f32.mrb[0].mxu0
        %v1241 = vpop.f32.mrb[0].mxu0
        %1242 = vdwg.mxu0
        %v1243 = vrcp.pop %v1193
        %v1244 = vmul.f32 %v1238, %v1243
        %v1245 = vpack.c.bf16 %v1244, %v1244
        %v1246 = vld [vmem:[#allocation2 + $0x8] sm:$0x3]
        %1247 = vrot.lane.b32.xlu0 %v794, 112
        %v1248 = vpop.permute.xlu0 %1247
        %v1250 = vsel %vm797, %v1248, 0
        %v1253 = vsel %vm801, %v1246, 0
        %1255 = vmatprep.subr.bf16.mxu0 0
        %1256 = vmatpush1.bf16.msra.mxu0 %v1253
        %1257 = vmatprep.subr.bf16.mxu0 0
        %1258 = vmatpush1.bf16.msra.mxu0 0
        %1259 = vmatprep.subr.bf16.mxu0 0
        %1260 = vmatpush1.bf16.msra.mxu0 0
        %1261 = vmatprep.subr.bf16.mxu0 0
        %1262 = vmatpush1.bf16.msra.mxu0 0
        %1263 = vmatprep.subr.bf16.mxu0 0
        %1264 = vmatpush1.bf16.msra.mxu0 0
        %1265 = vmatprep.subr.bf16.mxu0 0
        %1266 = vmatpush1.bf16.msra.mxu0 0
        %1267 = vmatprep.subr.bf16.mxu0 0
        %1268 = vmatpush1.bf16.msra.mxu0 0
        %1269 = vmatprep.subr.bf16.mxu0 0
        %1270 = vmatpush1.bf16.msra.mxu0 0
        %1271 = vmatprep.subr.bf16.mxu0 0
        %1272 = vmatpush1.bf16.msra.mxu0 0
        %1273 = vmatprep.subr.bf16.mxu0 0
        %1274 = vmatpush1.bf16.msra.mxu0 0
        %1275 = vmatprep.subr.bf16.mxu0 0
        %1276 = vmatpush1.bf16.msra.mxu0 0
        %1277 = vmatprep.subr.bf16.mxu0 0
        %1278 = vmatpush1.bf16.msra.mxu0 0
        %1279 = vmatprep.subr.bf16.mxu0 0
        %1280 = vmatpush1.bf16.msra.mxu0 0
        %1281 = vmatprep.subr.bf16.mxu0 0
        %1282 = vmatpush1.bf16.msra.mxu0 0
        %1283 = vmatprep.subr.bf16.mxu0 0
        %1284 = vmatpush1.bf16.msra.mxu0 0
        %1285 = vmatprep.subr.bf16.mxu0 0
        %1286 = vmatpush1.bf16.msra.mxu0 0
        %1287 = vmatprep.mubr.bf16.mxu0 0
        %1288 = vmatmul.mubr.bf16.gmra.mrb[0].mxu0 %v1250
        %v1289 = vpop.f32.mrb[0].mxu0
        %v1290 = vadd.f32 0.0, %v1289
        %v1291 = vpop.f32.mrb[0].mxu0
        %v1292 = vpop.f32.mrb[0].mxu0
        %v1293 = vpop.f32.mrb[0].mxu0
        %1294 = vdwg.mxu0
        %v1295 = vsel %vm845, %v1290, -inf
        %1296 = vmax.xlane.f32.xlu0 %v1295
        %v1297 = vpop.xlane.xlu0 %1296
        %v1298 = vsub.f32 %v1290, %v1297
        %v1299 = vmul.f32 %v1298, 1.442695
        %v1300 = vpow.pop %v1299
        %v1301 = vsel %vm845, %v1300, 0.0
        %1302 = vadd.xlane.f32.xlu0 %v1301
        %v1303 = vpop.xlane.xlu0 %1302
        %v1304 = vpack.c.bf16 %v1300, %v1300
        %1305 = vrot.lane.b32.xlu0 %v970, 112
        %v1306 = vpop.permute.xlu0 %1305
        %v1308 = vsel %vm845, %v1304, 0
        %v1311 = vsel %vm859, %v1306, 0
        %1313 = vmatprep.subr.bf16.mxu0 0
        %1314 = vmatpush1.bf16.msra.mxu0 %v1311
        %1315 = vmatprep.subr.bf16.mxu0 0
        %1316 = vmatpush1.bf16.msra.mxu0 0
        %1317 = vmatprep.subr.bf16.mxu0 0
        %1318 = vmatpush1.bf16.msra.mxu0 0
        %1319 = vmatprep.subr.bf16.mxu0 0
        %1320 = vmatpush1.bf16.msra.mxu0 0
        %1321 = vmatprep.subr.bf16.mxu0 0
        %1322 = vmatpush1.bf16.msra.mxu0 0
        %1323 = vmatprep.subr.bf16.mxu0 0
        %1324 = vmatpush1.bf16.msra.mxu0 0
        %1325 = vmatprep.subr.bf16.mxu0 0
        %1326 = vmatpush1.bf16.msra.mxu0 0
        %1327 = vmatprep.subr.bf16.mxu0 0
        %1328 = vmatpush1.bf16.msra.mxu0 0
        %1329 = vmatprep.subr.bf16.mxu0 0
        %1330 = vmatpush1.bf16.msra.mxu0 0
        %1331 = vmatprep.subr.bf16.mxu0 0
        %1332 = vmatpush1.bf16.msra.mxu0 0
        %1333 = vmatprep.subr.bf16.mxu0 0
        %1334 = vmatpush1.bf16.msra.mxu0 0
        %1335 = vmatprep.subr.bf16.mxu0 0
        %1336 = vmatpush1.bf16.msra.mxu0 0
        %1337 = vmatprep.subr.bf16.mxu0 0
        %1338 = vmatpush1.bf16.msra.mxu0 0
        %1339 = vmatprep.subr.bf16.mxu0 0
        %1340 = vmatpush1.bf16.msra.mxu0 0
        %1341 = vmatprep.subr.bf16.mxu0 0
        %1342 = vmatpush1.bf16.msra.mxu0 0
        %1343 = vmatprep.subr.bf16.mxu0 0
        %1344 = vmatpush1.bf16.msra.mxu0 0
        %1345 = vmatprep.mubr.bf16.mxu0 0
        %1346 = vmatmul.mubr.bf16.gmra.mrb[0].mxu0 %v1308
        %v1347 = vpop.f32.mrb[0].mxu0
        %v1348 = vadd.f32 0.0, %v1347
        %v1349 = vpop.f32.mrb[0].mxu0
        %v1350 = vpop.f32.mrb[0].mxu0
        %v1351 = vpop.f32.mrb[0].mxu0
        %1352 = vdwg.mxu0
        %v1353 = vrcp.pop %v1303
        %v1354 = vmul.f32 %v1348, %v1353
        %v1355 = vpack.c.bf16 %v1354, %v1354
        %v1356 = vld [vmem:[#allocation2 + $0x8] sm:$0xc]
        %1357 = vrot.lane.b32.xlu0 %v794, 108
        %v1358 = vpop.permute.xlu0 %1357
        %v1360 = vrot.slane %v1356, 2
        %v1362 = vsel %vm797, %v1358, 0
        %v1365 = vsel %vm801, %v1360, 0
        %1367 = vmatprep.subr.bf16.mxu0 0
        %1368 = vmatpush1.bf16.msra.mxu0 %v1365
        %1369 = vmatprep.subr.bf16.mxu0 0
        %1370 = vmatpush1.bf16.msra.mxu0 0
        %1371 = vmatprep.subr.bf16.mxu0 0
        %1372 = vmatpush1.bf16.msra.mxu0 0
        %1373 = vmatprep.subr.bf16.mxu0 0
        %1374 = vmatpush1.bf16.msra.mxu0 0
        %1375 = vmatprep.subr.bf16.mxu0 0
        %1376 = vmatpush1.bf16.msra.mxu0 0
        %1377 = vmatprep.subr.bf16.mxu0 0
        %1378 = vmatpush1.bf16.msra.mxu0 0
        %1379 = vmatprep.subr.bf16.mxu0 0
        %1380 = vmatpush1.bf16.msra.mxu0 0
        %1381 = vmatprep.subr.bf16.mxu0 0
        %1382 = vmatpush1.bf16.msra.mxu0 0
        %1383 = vmatprep.subr.bf16.mxu0 0
        %1384 = vmatpush1.bf16.msra.mxu0 0
        %1385 = vmatprep.subr.bf16.mxu0 0
        %1386 = vmatpush1.bf16.msra.mxu0 0
        %1387 = vmatprep.subr.bf16.mxu0 0
        %1388 = vmatpush1.bf16.msra.mxu0 0
        %1389 = vmatprep.subr.bf16.mxu0 0
        %1390 = vmatpush1.bf16.msra.mxu0 0
        %1391 = vmatprep.subr.bf16.mxu0 0
        %1392 = vmatpush1.bf16.msra.mxu0 0
        %1393 = vmatprep.subr.bf16.mxu0 0
        %1394 = vmatpush1.bf16.msra.mxu0 0
        %1395 = vmatprep.subr.bf16.mxu0 0
        %1396 = vmatpush1.bf16.msra.mxu0 0
        %1397 = vmatprep.subr.bf16.mxu0 0
        %1398 = vmatpush1.bf16.msra.mxu0 0
        %1399 = vmatprep.mubr.bf16.mxu0 0
        %1400 = vmatmul.mubr.bf16.gmra.mrb[0].mxu0 %v1362
        %v1401 = vpop.f32.mrb[0].mxu0
        %v1402 = vadd.f32 0.0, %v1401
        %v1403 = vpop.f32.mrb[0].mxu0
        %v1404 = vpop.f32.mrb[0].mxu0
        %v1405 = vpop.f32.mrb[0].mxu0
        %1406 = vdwg.mxu0
        %v1407 = vsel %vm845, %v1402, -inf
        %1408 = vmax.xlane.f32.xlu0 %v1407
        %v1409 = vpop.xlane.xlu0 %1408
        %v1410 = vsub.f32 %v1402, %v1409
        %v1411 = vmul.f32 %v1410, 1.442695
        %v1412 = vpow.pop %v1411
        %v1413 = vsel %vm845, %v1412, 0.0
        %1414 = vadd.xlane.f32.xlu0 %v1413
        %v1415 = vpop.xlane.xlu0 %1414
        %v1416 = vpack.c.bf16 %v1412, %v1412
        %1417 = vrot.lane.b32.xlu0 %v970, 108
        %v1418 = vpop.permute.xlu0 %1417
        %v1420 = vsel %vm845, %v1416, 0
        %v1423 = vsel %vm859, %v1418, 0
        %1425 = vmatprep.subr.bf16.mxu0 0
        %1426 = vmatpush1.bf16.msra.mxu0 %v1423
        %1427 = vmatprep.subr.bf16.mxu0 0
        %1428 = vmatpush1.bf16.msra.mxu0 0
        %1429 = vmatprep.subr.bf16.mxu0 0
        %1430 = vmatpush1.bf16.msra.mxu0 0
        %1431 = vmatprep.subr.bf16.mxu0 0
        %1432 = vmatpush1.bf16.msra.mxu0 0
        %1433 = vmatprep.subr.bf16.mxu0 0
        %1434 = vmatpush1.bf16.msra.mxu0 0
        %1435 = vmatprep.subr.bf16.mxu0 0
        %1436 = vmatpush1.bf16.msra.mxu0 0
        %1437 = vmatprep.subr.bf16.mxu0 0
        %1438 = vmatpush1.bf16.msra.mxu0 0
        %1439 = vmatprep.subr.bf16.mxu0 0
        %1440 = vmatpush1.bf16.msra.mxu0 0
        %1441 = vmatprep.subr.bf16.mxu0 0
        %1442 = vmatpush1.bf16.msra.mxu0 0
        %1443 = vmatprep.subr.bf16.mxu0 0
        %1444 = vmatpush1.bf16.msra.mxu0 0
        %1445 = vmatprep.subr.bf16.mxu0 0
        %1446 = vmatpush1.bf16.msra.mxu0 0
        %1447 = vmatprep.subr.bf16.mxu0 0
        %1448 = vmatpush1.bf16.msra.mxu0 0
        %1449 = vmatprep.subr.bf16.mxu0 0
        %1450 = vmatpush1.bf16.msra.mxu0 0
        %1451 = vmatprep.subr.bf16.mxu0 0
        %1452 = vmatpush1.bf16.msra.mxu0 0
        %1453 = vmatprep.subr.bf16.mxu0 0
        %1454 = vmatpush1.bf16.msra.mxu0 0
        %1455 = vmatprep.subr.bf16.mxu0 0
        %1456 = vmatpush1.bf16.msra.mxu0 0
        %1457 = vmatprep.mubr.bf16.mxu0 0
        %1458 = vmatmul.mubr.bf16.gmra.mrb[0].mxu0 %v1420
        %v1459 = vpop.f32.mrb[0].mxu0
        %v1460 = vadd.f32 0.0, %v1459
        %v1461 = vpop.f32.mrb[0].mxu0
        %v1462 = vpop.f32.mrb[0].mxu0
        %v1463 = vpop.f32.mrb[0].mxu0
        %1464 = vdwg.mxu0
        %v1465 = vrcp.pop %v1415
        %v1466 = vmul.f32 %v1460, %v1465
        %v1467 = vpack.c.bf16 %v1466, %v1466
        %v1468 = vld [vmem:[#allocation2 + $0x8] sm:$0x30]
        %1469 = vrot.lane.b32.xlu0 %v794, 104
        %v1470 = vpop.permute.xlu0 %1469
        %v1472 = vrot.slane %v1468, 4
        %v1474 = vsel %vm797, %v1470, 0
        %v1477 = vsel %vm801, %v1472, 0
        %1479 = vmatprep.subr.bf16.mxu0 0
        %1480 = vmatpush1.bf16.msra.mxu0 %v1477
        %1481 = vmatprep.subr.bf16.mxu0 0
        %1482 = vmatpush1.bf16.msra.mxu0 0
        %1483 = vmatprep.subr.bf16.mxu0 0
        %1484 = vmatpush1.bf16.msra.mxu0 0
        %1485 = vmatprep.subr.bf16.mxu0 0
        %1486 = vmatpush1.bf16.msra.mxu0 0
        %1487 = vmatprep.subr.bf16.mxu0 0
        %1488 = vmatpush1.bf16.msra.mxu0 0
        %1489 = vmatprep.subr.bf16.mxu0 0
        %1490 = vmatpush1.bf16.msra.mxu0 0
        %1491 = vmatprep.subr.bf16.mxu0 0
        %1492 = vmatpush1.bf16.msra.mxu0 0
        %1493 = vmatprep.subr.bf16.mxu0 0
        %1494 = vmatpush1.bf16.msra.mxu0 0
        %1495 = vmatprep.subr.bf16.mxu0 0
        %1496 = vmatpush1.bf16.msra.mxu0 0
        %1497 = vmatprep.subr.bf16.mxu0 0
        %1498 = vmatpush1.bf16.msra.mxu0 0
        %1499 = vmatprep.subr.bf16.mxu0 0
        %1500 = vmatpush1.bf16.msra.mxu0 0
        %1501 = vmatprep.subr.bf16.mxu0 0
        %1502 = vmatpush1.bf16.msra.mxu0 0
        %1503 = vmatprep.subr.bf16.mxu0 0
        %1504 = vmatpush1.bf16.msra.mxu0 0
        %1505 = vmatprep.subr.bf16.mxu0 0
        %1506 = vmatpush1.bf16.msra.mxu0 0
        %1507 = vmatprep.subr.bf16.mxu0 0
        %1508 = vmatpush1.bf16.msra.mxu0 0
        %1509 = vmatprep.subr.bf16.mxu0 0
        %1510 = vmatpush1.bf16.msra.mxu0 0
        %1511 = vmatprep.mubr.bf16.mxu0 0
        %1512 = vmatmul.mubr.bf16.gmra.mrb[0].mxu0 %v1474
        %v1513 = vpop.f32.mrb[0].mxu0
        %v1514 = vadd.f32 0.0, %v1513
        %v1515 = vpop.f32.mrb[0].mxu0
        %v1516 = vpop.f32.mrb[0].mxu0
        %v1517 = vpop.f32.mrb[0].mxu0
        %1518 = vdwg.mxu0
        %v1519 = vsel %vm845, %v1514, -inf
        %1520 = vmax.xlane.f32.xlu0 %v1519
        %v1521 = vpop.xlane.xlu0 %1520
        %v1522 = vsub.f32 %v1514, %v1521
        %v1523 = vmul.f32 %v1522, 1.442695
        %v1524 = vpow.pop %v1523
        %v1525 = vsel %vm845, %v1524, 0.0
        %1526 = vadd.xlane.f32.xlu0 %v1525
        %v1527 = vpop.xlane.xlu0 %1526
        %v1528 = vpack.c.bf16 %v1524, %v1524
        %1529 = vrot.lane.b32.xlu0 %v970, 104
        %v1530 = vpop.permute.xlu0 %1529
        %v1532 = vsel %vm845, %v1528, 0
        %v1535 = vsel %vm859, %v1530, 0
        %1537 = vmatprep.subr.bf16.mxu0 0
        %1538 = vmatpush1.bf16.msra.mxu0 %v1535
        %1539 = vmatprep.subr.bf16.mxu0 0
        %1540 = vmatpush1.bf16.msra.mxu0 0
        %1541 = vmatprep.subr.bf16.mxu0 0
        %1542 = vmatpush1.bf16.msra.mxu0 0
        %1543 = vmatprep.subr.bf16.mxu0 0
        %1544 = vmatpush1.bf16.msra.mxu0 0
        %1545 = vmatprep.subr.bf16.mxu0 0
        %1546 = vmatpush1.bf16.msra.mxu0 0
        %1547 = vmatprep.subr.bf16.mxu0 0
        %1548 = vmatpush1.bf16.msra.mxu0 0
        %1549 = vmatprep.subr.bf16.mxu0 0
        %1550 = vmatpush1.bf16.msra.mxu0 0
        %1551 = vmatprep.subr.bf16.mxu0 0
        %1552 = vmatpush1.bf16.msra.mxu0 0
        %1553 = vmatprep.subr.bf16.mxu0 0
        %1554 = vmatpush1.bf16.msra.mxu0 0
        %1555 = vmatprep.subr.bf16.mxu0 0
        %1556 = vmatpush1.bf16.msra.mxu0 0
        %1557 = vmatprep.subr.bf16.mxu0 0
        %1558 = vmatpush1.bf16.msra.mxu0 0
        %1559 = vmatprep.subr.bf16.mxu0 0
        %1560 = vmatpush1.bf16.msra.mxu0 0
        %1561 = vmatprep.subr.bf16.mxu0 0
        %1562 = vmatpush1.bf16.msra.mxu0 0
        %1563 = vmatprep.subr.bf16.mxu0 0
        %1564 = vmatpush1.bf16.msra.mxu0 0
        %1565 = vmatprep.subr.bf16.mxu0 0
        %1566 = vmatpush1.bf16.msra.mxu0 0
        %1567 = vmatprep.subr.bf16.mxu0 0
        %1568 = vmatpush1.bf16.msra.mxu0 0
        %1569 = vmatprep.mubr.bf16.mxu0 0
        %1570 = vmatmul.mubr.bf16.gmra.mrb[0].mxu0 %v1532
        %v1571 = vpop.f32.mrb[0].mxu0
        %v1572 = vadd.f32 0.0, %v1571
        %v1573 = vpop.f32.mrb[0].mxu0
        %v1574 = vpop.f32.mrb[0].mxu0
        %v1575 = vpop.f32.mrb[0].mxu0
        %1576 = vdwg.mxu0
        %v1577 = vrcp.pop %v1527
        %v1578 = vmul.f32 %v1572, %v1577
        %v1579 = vpack.c.bf16 %v1578, %v1578
        %v1580 = vld [vmem:[#allocation2 + $0x8] sm:$0xc0]
        %1581 = vrot.lane.b32.xlu0 %v794, 100
        %v1582 = vpop.permute.xlu0 %1581
        %v1584 = vrot.slane %v1580, 6
        %v1586 = vsel %vm797, %v1582, 0
        %v1589 = vsel %vm801, %v1584, 0
        %1591 = vmatprep.subr.bf16.mxu0 0
        %1592 = vmatpush1.bf16.msra.mxu0 %v1589
        %1593 = vmatprep.subr.bf16.mxu0 0
        %1594 = vmatpush1.bf16.msra.mxu0 0
        %1595 = vmatprep.subr.bf16.mxu0 0
        %1596 = vmatpush1.bf16.msra.mxu0 0
        %1597 = vmatprep.subr.bf16.mxu0 0
        %1598 = vmatpush1.bf16.msra.mxu0 0
        %1599 = vmatprep.subr.bf16.mxu0 0
        %1600 = vmatpush1.bf16.msra.mxu0 0
        %1601 = vmatprep.subr.bf16.mxu0 0
        %1602 = vmatpush1.bf16.msra.mxu0 0
        %1603 = vmatprep.subr.bf16.mxu0 0
        %1604 = vmatpush1.bf16.msra.mxu0 0
        %1605 = vmatprep.subr.bf16.mxu0 0
        %1606 = vmatpush1.bf16.msra.mxu0 0
        %1607 = vmatprep.subr.bf16.mxu0 0
        %1608 = vmatpush1.bf16.msra.mxu0 0
        %1609 = vmatprep.subr.bf16.mxu0 0
        %1610 = vmatpush1.bf16.msra.mxu0 0
        %1611 = vmatprep.subr.bf16.mxu0 0
        %1612 = vmatpush1.bf16.msra.mxu0 0
        %1613 = vmatprep.subr.bf16.mxu0 0
        %1614 = vmatpush1.bf16.msra.mxu0 0
        %1615 = vmatprep.subr.bf16.mxu0 0
        %1616 = vmatpush1.bf16.msra.mxu0 0
        %1617 = vmatprep.subr.bf16.mxu0 0
        %1618 = vmatpush1.bf16.msra.mxu0 0
        %1619 = vmatprep.subr.bf16.mxu0 0
        %1620 = vmatpush1.bf16.msra.mxu0 0
        %1621 = vmatprep.subr.bf16.mxu0 0
        %1622 = vmatpush1.bf16.msra.mxu0 0
        %1623 = vmatprep.mubr.bf16.mxu0 0
        %1624 = vmatmul.mubr.bf16.gmra.mrb[0].mxu0 %v1586
        %v1625 = vpop.f32.mrb[0].mxu0
        %v1626 = vadd.f32 0.0, %v1625
        %v1627 = vpop.f32.mrb[0].mxu0
        %v1628 = vpop.f32.mrb[0].mxu0
        %v1629 = vpop.f32.mrb[0].mxu0
        %1630 = vdwg.mxu0
        %v1631 = vsel %vm845, %v1626, -inf
        %1632 = vmax.xlane.f32.xlu0 %v1631
        %v1633 = vpop.xlane.xlu0 %1632
        %v1634 = vsub.f32 %v1626, %v1633
        %v1635 = vmul.f32 %v1634, 1.442695
        %v1636 = vpow.pop %v1635
        %v1637 = vsel %vm845, %v1636, 0.0
        %1638 = vadd.xlane.f32.xlu0 %v1637
        %v1639 = vpop.xlane.xlu0 %1638
        %v1640 = vpack.c.bf16 %v1636, %v1636
        %1641 = vrot.lane.b32.xlu0 %v970, 100
        %v1642 = vpop.permute.xlu0 %1641
        %v1644 = vsel %vm845, %v1640, 0
        %v1647 = vsel %vm859, %v1642, 0
        %1649 = vmatprep.subr.bf16.mxu0 0
        %1650 = vmatpush1.bf16.msra.mxu0 %v1647
        %1651 = vmatprep.subr.bf16.mxu0 0
        %1652 = vmatpush1.bf16.msra.mxu0 0
        %1653 = vmatprep.subr.bf16.mxu0 0
        %1654 = vmatpush1.bf16.msra.mxu0 0
        %1655 = vmatprep.subr.bf16.mxu0 0
        %1656 = vmatpush1.bf16.msra.mxu0 0
        %1657 = vmatprep.subr.bf16.mxu0 0
        %1658 = vmatpush1.bf16.msra.mxu0 0
        %1659 = vmatprep.subr.bf16.mxu0 0
        %1660 = vmatpush1.bf16.msra.mxu0 0
        %1661 = vmatprep.subr.bf16.mxu0 0
        %1662 = vmatpush1.bf16.msra.mxu0 0
        %1663 = vmatprep.subr.bf16.mxu0 0
        %1664 = vmatpush1.bf16.msra.mxu0 0
        %1665 = vmatprep.subr.bf16.mxu0 0
        %1666 = vmatpush1.bf16.msra.mxu0 0
        %1667 = vmatprep.subr.bf16.mxu0 0
        %1668 = vmatpush1.bf16.msra.mxu0 0
        %1669 = vmatprep.subr.bf16.mxu0 0
        %1670 = vmatpush1.bf16.msra.mxu0 0
        %1671 = vmatprep.subr.bf16.mxu0 0
        %1672 = vmatpush1.bf16.msra.mxu0 0
        %1673 = vmatprep.subr.bf16.mxu0 0
        %1674 = vmatpush1.bf16.msra.mxu0 0
        %1675 = vmatprep.subr.bf16.mxu0 0
        %1676 = vmatpush1.bf16.msra.mxu0 0
        %1677 = vmatprep.subr.bf16.mxu0 0
        %1678 = vmatpush1.bf16.msra.mxu0 0
        %1679 = vmatprep.subr.bf16.mxu0 0
        %1680 = vmatpush1.bf16.msra.mxu0 0
        %1681 = vmatprep.mubr.bf16.mxu0 0
        %1682 = vmatmul.mubr.bf16.gmra.mrb[0].mxu0 %v1644
        %v1683 = vpop.f32.mrb[0].mxu0
        %v1684 = vadd.f32 0.0, %v1683
        %v1685 = vpop.f32.mrb[0].mxu0
        %v1686 = vpop.f32.mrb[0].mxu0
        %v1687 = vpop.f32.mrb[0].mxu0
        %1688 = vdwg.mxu0
        %v1689 = vrcp.pop %v1639
        %v1690 = vmul.f32 %v1684, %v1689
        %v1691 = vpack.c.bf16 %v1690, %v1690
        %1693 = vrot.lane.b32.xlu0 %v1021, 4
        %v1694 = vpop.permute.xlu0 %1693
        %1696 = vrot.lane.b32.xlu0 %v1133, 8
        %v1697 = vpop.permute.xlu0 %1696
        %1699 = vrot.lane.b32.xlu0 %v1245, 12
        %v1700 = vpop.permute.xlu0 %1699
        %1702 = vrot.lane.b32.xlu0 %v1355, 16
        %v1703 = vpop.permute.xlu0 %1702
        %1705 = vrot.lane.b32.xlu0 %v1467, 20
        %v1706 = vpop.permute.xlu0 %1705
        %1708 = vrot.lane.b32.xlu0 %v1579, 24
        %v1709 = vpop.permute.xlu0 %1708
        %1711 = vrot.lane.b32.xlu0 %v1691, 28
        %v1712 = vpop.permute.xlu0 %1711
        %v1715 = vsel %vm797, %v905, %v1694
        %v1717 = vsel %vm845, %v1715, %v1697
        %vm1718 = vcmask 97280
        %v1720 = vsel %vm1718, %v1717, %v1700
        %vm1721 = vcmask 130048
        %v1723 = vsel %vm1721, %v1720, %v1703
        %vm1724 = vcmask 162816
        %v1726 = vsel %vm1724, %v1723, %v1706
        %vm1727 = vcmask 195584
        %v1729 = vsel %vm1727, %v1726, %v1709
        %vm1730 = vcmask 228352
        %v1732 = vsel %vm1730, %v1729, %v1712
        %v1733 = vld [vmem:[%s9] sm:$0xf]
        %v1734 = vld [vmem:[%s9 + $0x4] sm:$0xf]
        %v1735 = vld [vmem:[%s9 + $0x8] sm:$0xf]
        %v1736 = vld [vmem:[%s9 + $0xc] sm:$0xf]
        %v1737 = vld [vmem:[%s10] sm:$0x1]
        %v1739 = vlaneseq
        %v1740 = vshrl.u32 %v1739, 7
        %v1741 = vsub.s32 0, %v1740
        %v1742 = vrot.slane %v1737, %v1741
        %v1748 = vunpack.c.l.b16 %v1733
        %v1749 = vunpack.c.l.b16 %v1734
        %v1750 = vunpack.c.l.b16 %v1735
        %v1751 = vunpack.c.l.b16 %v1736
        %v1752 = vpack.c.b16 %v1749, %v1748
        %v1753 = vpack.c.b16 %v1751, %v1750
        %v1756 = vsel %vm697, %v1732, 0
        %1758 = vmatprep.subr.bf16.mxu0 0
        %1759 = vmatpush1.bf16.msra.mxu0 %v1752
        %1760 = vmatprep.subr.bf16.mxu0 0
        %1761 = vmatpush1.bf16.msra.mxu0 %v1753
        %1762 = vmatprep.subr.bf16.mxu0 0
        %1763 = vmatpush1.bf16.msra.mxu0 0
        %1764 = vmatprep.subr.bf16.mxu0 0
        %1765 = vmatpush1.bf16.msra.mxu0 0
        %1766 = vmatprep.subr.bf16.mxu0 0
        %1767 = vmatpush1.bf16.msra.mxu0 0
        %1768 = vmatprep.subr.bf16.mxu0 0
        %1769 = vmatpush1.bf16.msra.mxu0 0
        %1770 = vmatprep.subr.bf16.mxu0 0
        %1771 = vmatpush1.bf16.msra.mxu0 0
        %1772 = vmatprep.subr.bf16.mxu0 0
        %1773 = vmatpush1.bf16.msra.mxu0 0
        %1774 = vmatprep.subr.bf16.mxu0 0
        %1775 = vmatpush1.bf16.msra.mxu0 0
        %1776 = vmatprep.subr.bf16.mxu0 0
        %1777 = vmatpush1.bf16.msra.mxu0 0
        %1778 = vmatprep.subr.bf16.mxu0 0
        %1779 = vmatpush1.bf16.msra.mxu0 0
        %1780 = vmatprep.subr.bf16.mxu0 0
        %1781 = vmatpush1.bf16.msra.mxu0 0
        %1782 = vmatprep.subr.bf16.mxu0 0
        %1783 = vmatpush1.bf16.msra.mxu0 0
        %1784 = vmatprep.subr.bf16.mxu0 0
        %1785 = vmatpush1.bf16.msra.mxu0 0
        %1786 = vmatprep.subr.bf16.mxu0 0
        %1787 = vmatpush1.bf16.msra.mxu0 0
        %1788 = vmatprep.subr.bf16.mxu0 0
        %1789 = vmatpush1.bf16.msra.mxu0 0
        %1790 = vmatprep.mubr.bf16.mxu0 0
        %1791 = vmatmul.mubr.bf16.gmra.mrb[0].mxu0 %v1756
        %v1792 = vpop.f32.mrb[0].mxu0
        %v1793 = vadd.f32 %v1742, %v1792
        %v1794 = vpop.f32.mrb[0].mxu0
        %v1795 = vpop.f32.mrb[0].mxu0
        %v1796 = vpop.f32.mrb[0].mxu0
        %1797 = vdwg.mxu0
        %v1798 = vadd.f32 %v694, %v1793
        %v1799 = vld [vmem:[%s556] sm:$0x1]
        %v1800 = vld [vmem:[%s559] sm:$0x1]
        %v1801 = vsel %vm697, %v1798, 0.0
        %1802 = vadd.xlane.f32.xlu0 %v1801
        %v1803 = vpop.xlane.xlu0 %1802
        %v1804 = vmul.f32 %v1803, %v701
        %v1805 = vsub.f32 %v1798, %v1804
        %v1806 = vmul.f32 %v1805, %v1805
        %v1807 = vsel %vm697, %v1806, 0.0
        %1808 = vadd.xlane.f32.xlu0 %v1807
        %v1809 = vpop.xlane.xlu0 %1808
        %v1810 = vmul.f32 %v1809, %v701
        %v1811 = vadd.f32 %v1810, 1e-06
        %v1812 = vrsqrt.pop %v1811
        %v1813 = vmul.f32 %v1805, %v1812
        %v1815 = vlaneseq
        %v1816 = vshrl.u32 %v1815, 7
        %v1817 = vsub.s32 0, %v1816
        %v1818 = vrot.slane %v1799, %v1817
        %v1820 = vmul.f32 %v1818, %v1813
        %v1822 = vlaneseq
        %v1823 = vshrl.u32 %v1822, 7
        %v1824 = vsub.s32 0, %v1823
        %v1825 = vrot.slane %v1800, %v1824
        %v1827 = vadd.f32 %v1820, %v1825
        %v1828 = vpack.c.bf16 %v1827, %v1827
        %v1829 = vld [vmem:[%s12] sm:$0x1]
        %v1830 = vld [vmem:[%s11] sm:$0xf]
        %v1831 = vld [vmem:[%s11 + $0x4] sm:$0xf]
        %v1832 = vld [vmem:[%s11 + $0x8] sm:$0xf]
        %v1833 = vld [vmem:[%s11 + $0xc] sm:$0xf]
        %v1835 = vlaneseq
        %v1836 = vshrl.u32 %v1835, 7
        %v1837 = vsub.s32 0, %v1836
        %v1838 = vrot.slane %v1829, %v1837
        %v1844 = vunpack.c.l.b16 %v1830
        %v1845 = vunpack.c.l.b16 %v1831
        %v1846 = vunpack.c.l.b16 %v1832
        %v1847 = vunpack.c.l.b16 %v1833
        %v1848 = vpack.c.b16 %v1845, %v1844
        %v1849 = vpack.c.b16 %v1847, %v1846
        %v1853 = vsel %vm697, %v1828, 0
        %1855 = vmatprep.subr.bf16.mxu0 0
        %1856 = vmatpush1.bf16.msra.mxu0 %v1848
        %1857 = vmatprep.subr.bf16.mxu0 0
        %1858 = vmatpush1.bf16.msra.mxu0 %v1849
        %1859 = vmatprep.subr.bf16.mxu0 0
        %1860 = vmatpush1.bf16.msra.mxu0 0
        %1861 = vmatprep.subr.bf16.mxu0 0
        %1862 = vmatpush1.bf16.msra.mxu0 0
        %1863 = vmatprep.subr.bf16.mxu0 0
        %1864 = vmatpush1.bf16.msra.mxu0 0
        %1865 = vmatprep.subr.bf16.mxu0 0
        %1866 = vmatpush1.bf16.msra.mxu0 0
        %1867 = vmatprep.subr.bf16.mxu0 0
        %1868 = vmatpush1.bf16.msra.mxu0 0
        %1869 = vmatprep.subr.bf16.mxu0 0
        %1870 = vmatpush1.bf16.msra.mxu0 0
        %1871 = vmatprep.subr.bf16.mxu0 0
        %1872 = vmatpush1.bf16.msra.mxu0 0
        %1873 = vmatprep.subr.bf16.mxu0 0
        %1874 = vmatpush1.bf16.msra.mxu0 0
        %1875 = vmatprep.subr.bf16.mxu0 0
        %1876 = vmatpush1.bf16.msra.mxu0 0
        %1877 = vmatprep.subr.bf16.mxu0 0
        %1878 = vmatpush1.bf16.msra.mxu0 0
        %1879 = vmatprep.subr.bf16.mxu0 0
        %1880 = vmatpush1.bf16.msra.mxu0 0
        %1881 = vmatprep.subr.bf16.mxu0 0
        %1882 = vmatpush1.bf16.msra.mxu0 0
        %1883 = vmatprep.subr.bf16.mxu0 0
        %1884 = vmatpush1.bf16.msra.mxu0 0
        %1885 = vmatprep.subr.bf16.mxu0 0
        %1886 = vmatpush1.bf16.msra.mxu0 0
        %1887 = vmatprep.mubr.bf16.mxu0 0
        %1888 = vmatmul.mubr.bf16.gmra.mrb[0].mxu0 %v1853
        %v1889 = vpop.f32.mrb[0].mxu0
        %v1890 = vadd.f32 %v1838, %v1889
        %v1891 = vpop.f32.mrb[0].mxu0
        %v1892 = vpop.f32.mrb[0].mxu0
        %v1893 = vpop.f32.mrb[0].mxu0
        %1894 = vdwg.mxu0
        %v1895 = vmul.f32 %v1890, 0.5
        %v1896 = vmul.f32 %v1890, 0.70710677
        %v1897 = verf.f32.pop %v1896
        %v1898 = vadd.f32 %v1897, 1.0
        %v1899 = vmul.f32 %v1895, %v1898
        %v1900 = vpack.c.bf16 %v1899, %v1899
        %v1901 = vld [vmem:[%s13] sm:$0xf]
        %v1902 = vld [vmem:[%s13 + $0x4] sm:$0xf]
        %v1903 = vld [vmem:[%s13 + $0x8] sm:$0xf]
        %v1904 = vld [vmem:[%s13 + $0xc] sm:$0xf]
        %v1905 = vld [vmem:[%s13 + $0x10] sm:$0xf]
        %v1906 = vld [vmem:[%s13 + $0x14] sm:$0xf]
        %v1907 = vld [vmem:[%s13 + $0x18] sm:$0xf]
        %v1908 = vld [vmem:[%s13 + $0x1c] sm:$0xf]
        %v1909 = vld [vmem:[%s13 + $0x20] sm:$0xf]
        %v1910 = vld [vmem:[%s13 + $0x24] sm:$0xf]
        %v1911 = vld [vmem:[%s13 + $0x28] sm:$0xf]
        %v1912 = vld [vmem:[%s13 + $0x2c] sm:$0xf]
        %v1913 = vld [vmem:[%s13 + $0x30] sm:$0xf]
        %v1914 = vld [vmem:[%s13 + $0x34] sm:$0xf]
        %v1915 = vld [vmem:[%s13 + $0x38] sm:$0xf]
        %v1916 = vld [vmem:[%s13 + $0x3c] sm:$0xf]
        %v1933 = vunpack.c.l.b16 %v1901
        %v1934 = vunpack.c.l.b16 %v1902
        %v1935 = vunpack.c.l.b16 %v1903
        %v1936 = vunpack.c.l.b16 %v1904
        %v1937 = vunpack.c.l.b16 %v1905
        %v1938 = vunpack.c.l.b16 %v1906
        %v1939 = vunpack.c.l.b16 %v1907
        %v1940 = vunpack.c.l.b16 %v1908
        %v1941 = vunpack.c.l.b16 %v1909
        %v1942 = vunpack.c.l.b16 %v1910
        %v1943 = vunpack.c.l.b16 %v1911
        %v1944 = vunpack.c.l.b16 %v1912
        %v1945 = vunpack.c.l.b16 %v1913
        %v1946 = vunpack.c.l.b16 %v1914
        %v1947 = vunpack.c.l.b16 %v1915
        %v1948 = vunpack.c.l.b16 %v1916
        %v1949 = vpack.c.b16 %v1934, %v1933
        %v1950 = vpack.c.b16 %v1936, %v1935
        %v1951 = vpack.c.b16 %v1938, %v1937
        %v1952 = vpack.c.b16 %v1940, %v1939
        %v1953 = vpack.c.b16 %v1942, %v1941
        %v1954 = vpack.c.b16 %v1944, %v1943
        %v1955 = vpack.c.b16 %v1946, %v1945
        %v1956 = vpack.c.b16 %v1948, %v1947
        %1965 = vmatprep.subr.bf16.mxu0 0
        %1966 = vmatpush1.bf16.msra.mxu0 %v1949
        %1967 = vmatprep.subr.bf16.mxu0 0
        %1968 = vmatpush1.bf16.msra.mxu0 %v1950
        %1969 = vmatprep.subr.bf16.mxu0 0
        %1970 = vmatpush1.bf16.msra.mxu0 %v1951
        %1971 = vmatprep.subr.bf16.mxu0 0
        %1972 = vmatpush1.bf16.msra.mxu0 %v1952
        %1973 = vmatprep.subr.bf16.mxu0 0
        %1974 = vmatpush1.bf16.msra.mxu0 %v1953
        %1975 = vmatprep.subr.bf16.mxu0 0
        %1976 = vmatpush1.bf16.msra.mxu0 %v1954
        %1977 = vmatprep.subr.bf16.mxu0 0
        %1978 = vmatpush1.bf16.msra.mxu0 %v1955
        %1979 = vmatprep.subr.bf16.mxu0 0
        %1980 = vmatpush1.bf16.msra.mxu0 %v1956
        %1981 = vmatprep.subr.bf16.mxu0 0
        %1982 = vmatpush1.bf16.msra.mxu0 0
        %1983 = vmatprep.subr.bf16.mxu0 0
        %1984 = vmatpush1.bf16.msra.mxu0 0
        %1985 = vmatprep.subr.bf16.mxu0 0
        %1986 = vmatpush1.bf16.msra.mxu0 0
        %1987 = vmatprep.subr.bf16.mxu0 0
        %1988 = vmatpush1.bf16.msra.mxu0 0
        %1989 = vmatprep.subr.bf16.mxu0 0
        %1990 = vmatpush1.bf16.msra.mxu0 0
        %1991 = vmatprep.subr.bf16.mxu0 0
        %1992 = vmatpush1.bf16.msra.mxu0 0
        %1993 = vmatprep.subr.bf16.mxu0 0
        %1994 = vmatpush1.bf16.msra.mxu0 0
        %1995 = vmatprep.subr.bf16.mxu0 0
        %1996 = vmatpush1.bf16.msra.mxu0 0
        %1997 = vmatprep.mubr.bf16.mxu0 0
        %1998 = vmatmul.mubr.bf16.gmra.mrb[0].mxu0 %v1900
        %v1999 = vpop.f32.mrb[0].mxu0
        %v2000 = vadd.f32 0.0, %v1999
        %v2001 = vpop.f32.mrb[0].mxu0
        %v2002 = vpop.f32.mrb[0].mxu0
        %v2003 = vpop.f32.mrb[0].mxu0
        %2004 = vdwg.mxu0
        %v2005 = vadd.f32 %v1798, %v2000
        %v2006 = vld [vmem:[%s14] sm:$0x1]
        %v2008 = vlaneseq
        %v2009 = vshrl.u32 %v2008, 7
        %v2010 = vsub.s32 0, %v2009
        %v2011 = vrot.slane %v2006, %v2010
        %v2013 = vadd.f32 %v2005, %v2011
        %2014 = vst.msk [vmem:[%s543] sm:$0xff] %vm697, %v2013
        %s2015 = sand.u32 %s391, 1
        %s2016 = scalar_lea.sflag [#allocation5], %s2015
        %s2017 = sand.u32 %s391, 1
        %s2018 = smul.addr %s2017, 8
        %s2019 = scalar_lea.vmem [#allocation4], %s2018
        // Predicated region
        $region85: #{tpu_custom_call.1} parent=79 // pred_check
          %p2020 = pneg %p401
        $region86: #{tpu_custom_call.1} parent=79 // pred_check_branch
          %2022 = sbr.rel (%p2020) target = $region88
        $region87: #{tpu_custom_call.1} parent=79 // pred_region
          %s2024 = ssub.s32 128, 128
          %2025 = vsyncadd %s2016, %s2024
          %s2026 = sadd.s32 %s34, %s33
          %s2027 = smul.addr %s2026, 128
          %s2028 = scalar_lea.hbm %s15, %s2027
          %s2030 = sshll.u32 %s2019, 4
          %s2031 = int_to_ptr.vmem [resolvable:$true] %s2030
          %2033 = dma.vmem_to_hbm [thread:$0]  %s2031, 128, %s2028, %s2016
        $region88: #{tpu_custom_call.1} parent=79 // pred_fallthru
          _
      $region80: #{tpu_custom_call.1} parent=5 // pred_fallthru
        _
      %p2034 = scmp.le.s32.totalorder 2, %s24
      // Predicated region
      $region89: #{tpu_custom_call.1} parent=5 // pred_check
        %p2035 = pneg %p2034
      $region90: #{tpu_custom_call.1} parent=5 // pred_check_branch
        %2037 = sbr.rel (%p2035) target = $region92
      $region91: #{tpu_custom_call.1} parent=5 // pred_region
        %s2038 = ssub.s32 %s24, 2
        // Predicated region
        $region93: #{tpu_custom_call.1} parent=91 // pred_check
          %p2039 = pneg %p407
        $region94: #{tpu_custom_call.1} parent=91 // pred_check_branch
          %2041 = sbr.rel (%p2039) target = $region96
        $region95: #{tpu_custom_call.1} parent=91 // pred_region
          %s2042 = sand.u32 %s392, 1
          %s2043 = scalar_lea.sflag [#allocation5], %s2042
          %s2044 = sand.u32 %s392, 1
          %s2045 = smul.addr %s2044, 8
          %s2046 = scalar_lea.vmem [#allocation4], %s2045
          %2047 = dma.done %s2043, 128
        $region96: #{tpu_custom_call.1} parent=91 // pred_fallthru
          _
      $region92: #{tpu_custom_call.1} parent=5 // pred_fallthru
        _
    $region6: #{tpu_custom_call.1} parent=1 // loop_footer
      %s28 = sadd.s32 1, %s24
    $region7: #{tpu_custom_call.1} parent=1 // loop_footer_branch
      %23 = sbr.rel target = $region3
    $region8: #{tpu_custom_call.1} parent=1 // loop_exit
      _
    %2048 = vsyncpa [#allocation5], 1
    %s2049 = scalar_lea.sflag [#allocation5], 1
    %2050 = vsyncpa %s2049, 1

</llo_original>
